<compile_context>
chip_gen: v7x
topology: tpu7x:2x2x1
jax: 0.10.0
libtpu: 0.0.40
codegen_flags: <defaults>
</compile_context>

<pallas_src>
from functools import partial

import jax
import jax.numpy as jnp
from jax.experimental import pallas as pl
from jax.experimental.pallas import tpu as pltpu


CONV1D_CHANNELS = (16, 32)           # C1, C2
CONV2_KERNEL = 5                     # Kc
GCN_VMEM_LIMIT = 48 * 1024 * 1024    # scoped-VMEM ceiling for the A_hat-streaming calls


def _round_up(x, m):
    return ((x + m - 1) // m) * m


def _pick_row_tile(n):
    # bf16 A_hat row tiles: keep the sublane dim a multiple of 16 (bf16 packs 2 rows/sublane).
    if n <= 256:
        return 16
    tiles = -(-n // 256)
    return _round_up(-(-n // tiles), 16)


# ----------------------------------------------------------------------------
# Pallas kernels
# ----------------------------------------------------------------------------
def gcn_layer_kernel(a_ref, h_ref, w_ref, b_ref, o_ref):
    # a_ref: (TM, N) bf16 row tile of A_hat (streamed); h_ref: (N, H) f32 previous
    # activations (whole, resident); w_ref: (H, H); b_ref: (1, H); o_ref: (TM, H).
    # xw is tiny ([N,H]@[H,H]); recomputing it per row tile is hidden under the
    # mem-bound A_hat stream and keeps the row axis embarrassingly parallel.
    xw = jnp.dot(h_ref[...], w_ref[...], preferred_element_type=jnp.float32)
    g = jnp.dot(a_ref[...], xw.astype(jnp.bfloat16), preferred_element_type=jnp.float32)
    o_ref[...] = jnp.tanh(g + b_ref[...])


def gcn_final_kernel(a_ref, hlast_ref, *rest):
    # Final GCNConv(hidden -> 1) + assembly of the lane-dense concat slab.
    # rest = (h_1_tile, ..., h_L_tile, wl_ref, bl_ref, o_ref)
    *ht_refs, wl_ref, bl_ref, o_ref = rest
    g = jnp.dot(a_ref[...], hlast_ref[...].astype(jnp.bfloat16),
                preferred_element_type=jnp.float32)                               # [TM, H]
    # hidden -> 1 as a VPU reduction against the stored weight row (no lane-1 MXU matmul).
    hl = jnp.tanh(jnp.sum(g * wl_ref[...], axis=-1, keepdims=True) + bl_ref[...])  # [TM, 1]
    parts = [r[...] for r in ht_refs] + [hl]
    used = sum(p.shape[-1] for p in parts)
    pad = o_ref.shape[-1] - used
    if pad > 0:
        parts.append(jnp.zeros((o_ref.shape[0], pad), jnp.float32))
    o_ref[...] = jnp.concatenate(parts, axis=-1)                                   # one full-width store


def head_kernel(x_ref, w1_ref, b1_ref, w2_ref, b2_ref,
                l1w_ref, l1b_ref, l2w_ref, l2b_ref, o_ref, *, Kc, L, p_out):
    xg = x_ref[0]                                        # [k, d_pad]: this graph's sorted nodes
    # conv1 (Conv1d(1, C1, D, stride=D)) as a dense per-position matmul over the padded
    # feature lane (w1's pad rows are zero, slab pad columns are zero -> exact).
    y = jnp.dot(xg, w1_ref[...], preferred_element_type=jnp.float32) + b1_ref[...]
    y = jnp.maximum(y, 0.0)                              # [k, C1]
    # MaxPool1d(2, 2): static pairwise row max (any odd trailing position is dropped,
    # matching torch; do NOT "fix" the unused last row for odd k).
    pooled = jnp.concatenate(
        [jnp.maximum(y[2 * p:2 * p + 1, :], y[2 * p + 1:2 * p + 2, :])
         for p in range(p_out)], axis=0)                 # [p_out, C1]
    # conv2 (kernel Kc, stride 1) as Kc dense per-tap matmuls -- no im2col / block-diag weight.
    z = b2_ref[...]                                      # [1, C2] -> broadcasts over L positions
    for j in range(Kc):
        z = z + jnp.dot(pooled[j:j + L, :], w2_ref[j], preferred_element_type=jnp.float32)
    z = jnp.maximum(z, 0.0)                              # [L, C2]
    # lin1 (+ReLU); torch's channel-major flatten is folded into l1w's [L, C2, 128] packing.
    h = l1b_ref[...]                                     # [1, 128]
    for t in range(L):
        h = h + jnp.dot(z[t:t + 1, :], l1w_ref[t], preferred_element_type=jnp.float32)
    h = jnp.maximum(h, 0.0)                              # [1, 128]
    # dropout(p=0.5) is identity in eval mode.
    # lin2 (128 -> 1) as a VPU reduction; write a lane-dense 128-wide block (logit in lane 0).
    logit = jnp.sum(h * l2w_ref[...], axis=-1, keepdims=True) + l2b_ref[...]      # [1, 1]
    row = jnp.concatenate(
        [logit, jnp.zeros((1, o_ref.shape[-1] - 1), jnp.float32)], axis=-1)       # [1, 128]
    o_ref[...] = row[None]


# ----------------------------------------------------------------------------
# Pallas wrappers
# ----------------------------------------------------------------------------
def pallas_gcn_layer(a_bf16, h_in, w, b, tm):
    n_pad = a_bf16.shape[0]
    hdim = h_in.shape[1]
    grid = (n_pad // tm,)
    return pl.pallas_call(
        gcn_layer_kernel,
        out_shape=jax.ShapeDtypeStruct((n_pad, hdim), jnp.float32),
        grid_spec=pltpu.PrefetchScalarGridSpec(
            num_scalar_prefetch=0,
            grid=grid,
            in_specs=[
                pl.BlockSpec((tm, n_pad), lambda i: (i, 0)),     # A_hat row tile (bf16)
                pl.BlockSpec((n_pad, hdim), lambda i: (0, 0)),   # h_{l-1}, whole & resident
                pl.BlockSpec((hdim, hdim), lambda i: (0, 0)),
                pl.BlockSpec((1, hdim), lambda i: (0, 0)),
            ],
            out_specs=pl.BlockSpec((tm, hdim), lambda i: (i, 0)),
        ),
        compiler_params=pltpu.CompilerParams(
            dimension_semantics=("parallel",),
            vmem_limit_bytes=GCN_VMEM_LIMIT,
        ),
    )(a_bf16, h_in, w, b)


def pallas_gcn_final(a_bf16, hs, wl, bl, tm, d_pad):
    n_pad = a_bf16.shape[0]
    hdim = hs[0].shape[1]
    grid = (n_pad // tm,)
    in_specs = [pl.BlockSpec((tm, n_pad), lambda i: (i, 0)),     # A_hat row tile (bf16)
                pl.BlockSpec((n_pad, hdim), lambda i: (0, 0))]   # last hidden act, whole
    in_specs += [pl.BlockSpec((tm, hdim), lambda i: (i, 0)) for _ in hs]   # slab pieces, tiled
    in_specs += [pl.BlockSpec((1, hdim), lambda i: (0, 0)),
                 pl.BlockSpec((1, 1), lambda i: (0, 0))]
    return pl.pallas_call(
        gcn_final_kernel,
        out_shape=jax.ShapeDtypeStruct((n_pad, d_pad), jnp.float32),
        grid_spec=pltpu.PrefetchScalarGridSpec(
            num_scalar_prefetch=0,
            grid=grid,
            in_specs=in_specs,
            out_specs=pl.BlockSpec((tm, d_pad), lambda i: (i, 0)),
        ),
        compiler_params=pltpu.CompilerParams(
            dimension_semantics=("parallel",),
            vmem_limit_bytes=GCN_VMEM_LIMIT,
        ),
    )(a_bf16, hs[-1], *hs, wl, bl)


def pallas_dgcnn_head(x_pool, pk, k):
    bsz, kk, dp = x_pool.shape
    C1, C2 = CONV1D_CHANNELS
    Kc = CONV2_KERNEL
    p_out = (k - 2) // 2 + 1
    l_out = p_out - Kc + 1
    kern = partial(head_kernel, Kc=Kc, L=l_out, p_out=p_out)
    out = pl.pallas_call(
        kern,
        out_shape=jax.ShapeDtypeStruct((bsz, 1, 128), jnp.float32),
        grid_spec=pltpu.PrefetchScalarGridSpec(
            num_scalar_prefetch=0,
            grid=(bsz,),
            in_specs=[
                pl.BlockSpec((1, kk, dp), lambda b: (b, 0, 0)),      # one graph's sorted nodes
                pl.BlockSpec((dp, C1), lambda b: (0, 0)),
                pl.BlockSpec((1, C1), lambda b: (0, 0)),
                pl.BlockSpec((Kc, C1, C2), lambda b: (0, 0, 0)),
                pl.BlockSpec((1, C2), lambda b: (0, 0)),
                pl.BlockSpec((l_out, C2, 128), lambda b: (0, 0, 0)),
                pl.BlockSpec((1, 128), lambda b: (0, 0)),
                pl.BlockSpec((1, 128), lambda b: (0, 0)),
                pl.BlockSpec((1, 1), lambda b: (0, 0)),
            ],
            out_specs=pl.BlockSpec((1, 1, 128), lambda b: (b, 0, 0)),
        ),
        compiler_params=pltpu.CompilerParams(dimension_semantics=("parallel",)),
    )(x_pool, pk['w1p'], pk['b1'], pk['w2'], pk['b2'],
      pk['lw1'], pk['lb1'], pk['lw2'], pk['lb2'])
    return out[:, 0, :1]                                             # [B, 1]


# ----------------------------------------------------------------------------
# JAX glue (gathers / scatters / per-graph sorting: no clean Pallas equivalent)
# ----------------------------------------------------------------------------
def build_gcn_adj(edge_index, num_nodes):
    # Dense D^{-1/2} (A + I) D^{-1/2}, matching PyG GCNConv gcn_norm (edge_weight=1).
    row, col = edge_index[0], edge_index[1]
    a = jnp.zeros((num_nodes, num_nodes), jnp.float32).at[col, row].add(1.0)
    a = a + jnp.eye(num_nodes, dtype=jnp.float32)
    deg = a.sum(axis=1)
    dinv = jnp.where(deg > 0.0, 1.0 / jnp.sqrt(deg), 0.0)
    return dinv[:, None] * a * dinv[None, :]


def global_sort_pool(x, batch, k, num_graphs, n_max, key_col):
    # TODO(synk): per-graph sort stays in plain JAX (no Pallas sort primitive on TPU);
    # jnp.argsort tie-breaking may differ from torch.sort when equal keys straddle the
    # top-k cut, and the `== fill` sentinel assumes x contains no -inf/NaN.
    n, d = x.shape
    fill = jnp.min(x) - 1.0
    counts = jnp.zeros((num_graphs,), jnp.int32).at[batch].add(1)
    starts = jnp.cumsum(counts) - counts
    pos = jnp.arange(n, dtype=jnp.int32) - starts[batch]
    dense = jnp.full((num_graphs, n_max, d), fill, x.dtype).at[batch, pos].set(x)
    perm = jnp.argsort(-dense[:, :, key_col], axis=1)        # descending by last real channel
    dense = jnp.take_along_axis(dense, perm[:, :, None], axis=1)
    if n_max >= k:
        dense = dense[:, :k, :]
    else:
        pad = jnp.full((num_graphs, k - n_max, d), fill, x.dtype)
        dense = jnp.concatenate([dense, pad], axis=1)
    dense = jnp.where(dense == fill, 0.0, dense)
    return dense                                             # [B, k, d] (padded lanes kept)


# ----------------------------------------------------------------------------
# Parameters: torch-equivalent init + one-time packing for the kernels
# ----------------------------------------------------------------------------
def init_params(key, hidden, num_layers, max_z, k):
    C1, C2 = CONV1D_CHANNELS
    Kc = CONV2_KERNEL
    total_latent_dim = hidden * num_layers + 1
    dense_dim = int((k - 2) / 2 + 1)
    dense_dim = (dense_dim - Kc + 1) * C2

    keys = jax.random.split(key, 16)
    ki = iter(keys)
    p = {}
    p['z_emb'] = 0.1 * jax.random.normal(next(ki), (max_z, hidden), jnp.float32)

    convs = []
    in_c = hidden
    for _ in range(num_layers):
        w = 0.1 * jax.random.normal(next(ki), (in_c, hidden), jnp.float32)
        b = 0.1 * jax.random.normal(next(ki), (hidden,), jnp.float32)
        convs.append((w, b))
        in_c = hidden
    w = 0.1 * jax.random.normal(next(ki), (hidden, 1), jnp.float32)
    b = 0.1 * jax.random.normal(next(ki), (1,), jnp.float32)
    convs.append((w, b))
    p['convs'] = convs

    # Conv1d(1, C1, D, D): torch weight [C1, 1, D]   -> stored here as [D, C1]
    p['w1'] = 0.1 * jax.random.normal(next(ki), (total_latent_dim, C1), jnp.float32)
    p['b1'] = 0.1 * jax.random.normal(next(ki), (C1,), jnp.float32)
    # Conv1d(C1, C2, Kc, 1): torch weight [C2, C1, Kc] -> stored here as [Kc, C1, C2]
    p['w2'] = 0.1 * jax.random.normal(next(ki), (Kc, C1, C2), jnp.float32)
    p['b2'] = 0.1 * jax.random.normal(next(ki), (C2,), jnp.float32)
    # Linear(dense_dim, 128), Linear(128, 1) -> stored transposed (rows = torch flatten index)
    p['lw1'] = 0.1 * jax.random.normal(next(ki), (dense_dim, 128), jnp.float32)
    p['lb1'] = 0.1 * jax.random.normal(next(ki), (128,), jnp.float32)
    p['lw2'] = 0.1 * jax.random.normal(next(ki), (128, 1), jnp.float32)
    p['lb2'] = 0.1 * jax.random.normal(next(ki), (1,), jnp.float32)
    return p


def pack_params(p, hidden, num_layers, k):
    """One-time repacking of torch-semantic params into the kernel layouts."""
    C1, C2 = CONV1D_CHANNELS
    Kc = CONV2_KERNEL
    d_total = hidden * num_layers + 1
    d_pad = _round_up(d_total, 128)
    p_out = (k - 2) // 2 + 1
    l_out = p_out - Kc + 1

    packed = {'z_emb': p['z_emb']}

    # GCN stage: stacked hidden-layer weights + final (hidden -> 1) layer as a weight row.
    packed['wh'] = jnp.stack([w for (w, _) in p['convs'][:num_layers]])              # [L, H, H]
    packed['bh'] = jnp.stack([b for (_, b) in p['convs'][:num_layers]])[:, None, :]  # [L, 1, H]
    wl, bl = p['convs'][num_layers]
    packed['wl'] = wl.reshape(1, hidden)
    packed['bl'] = bl.reshape(1, 1)

    # conv1 weight padded along the feature axis to the slab's lane width; pad rows are zero
    # (and the slab's pad columns are zero), so the 128-wide contraction equals the D=65 conv.
    packed['w1p'] = jnp.zeros((d_pad, C1), jnp.float32).at[:d_total].set(p['w1'])
    packed['b1'] = p['b1'].reshape(1, C1)
    packed['w2'] = p['w2']                                   # [Kc, C1, C2], per-tap dense
    packed['b2'] = p['b2'].reshape(1, C2)
    # lin1: torch flattens [B, C2, L] channel-major (row index c2*L + t); regroup the rows to a
    # per-position [L, C2, 128] stack so the head needs no transpose and no flatten reshape.
    packed['lw1'] = p['lw1'].reshape(C2, l_out, 128).transpose(1, 0, 2)
    packed['lb1'] = p['lb1'].reshape(1, 128)
    packed['lw2'] = p['lw2'].reshape(1, 128)                 # lin2 as a weight row (VPU reduce)
    packed['lb2'] = p['lb2'].reshape(1, 1)
    return packed


# ----------------------------------------------------------------------------
# Forward
# ----------------------------------------------------------------------------
@partial(jax.jit, static_argnames=("num_graphs", "n_max", "k", "hidden", "num_layers"))
def dgcnn_forward(packed, z, edge_index, batch, *, num_graphs, n_max, k, hidden, num_layers):
    num_nodes = z.shape[0]
    d_total = hidden * num_layers + 1
    d_pad = _round_up(d_total, 128)

    # glue: z-embedding gather + dense normalized adjacency (z is 1-D, no dim=1 sum needed)
    x0 = jnp.take(packed['z_emb'], z, axis=0)                    # [N, hidden]
    a_hat = build_gcn_adj(edge_index, num_nodes)                 # [N, N] f32

    # Pad the node axis to a whole number of row tiles (no ragged blocks) and cast the N^2
    # operand to bf16 (halves HBM traffic / VMEM; matmuls still accumulate in f32).
    tm = _pick_row_tile(num_nodes)
    n_pad = _round_up(num_nodes, tm)
    a_bf16 = jnp.zeros((n_pad, n_pad), jnp.bfloat16)
    a_bf16 = a_bf16.at[:num_nodes, :num_nodes].set(a_hat.astype(jnp.bfloat16))
    h = jnp.zeros((n_pad, hidden), jnp.float32).at[:num_nodes].set(x0)

    # GCN stack: one row-parallel, A_hat-streaming call per layer; final call also
    # assembles the lane-dense [n_pad, 128] concat slab.
    hs = []
    for l in range(num_layers):
        h = pallas_gcn_layer(a_bf16, h, packed['wh'][l], packed['bh'][l], tm)
        hs.append(h)
    xslab = pallas_gcn_final(a_bf16, hs, packed['wl'], packed['bl'], tm, d_pad)
    xslab = xslab[:num_nodes]                 # drop tile-padding rows (lane width stays 128)

    # Per-graph top-k sort pooling (JAX glue); sort key is the last real channel of the slab.
    x_pool = global_sort_pool(xslab, batch, k, num_graphs, n_max, key_col=d_total - 1)

    # Head: conv1 + maxpool + conv2 + lin1 + lin2, "parallel" grid over graphs.
    return pallas_dgcnn_head(x_pool, packed, k)                  # [B, 1]


# ----------------------------------------------------------------------------
# Main
# ----------------------------------------------------------------------------
if __name__ == "__main__":
    hidden_channels = 32
    num_layers = 2
    max_z = 8
    k = 10                     # passed > 1, used directly (as in the module)

    nodes_per_graph = [14, 10]
    num_graphs = len(nodes_per_graph)
    num_nodes = sum(nodes_per_graph)
    n_max = max(nodes_per_graph)

    # batch vector (graphs contiguous, standard PyG batching)
    batch = jnp.concatenate([jnp.full((n,), i, jnp.int32)
                             for i, n in enumerate(nodes_per_graph)])

    # deterministic ring edges within each graph (undirected)
    edges = []
    off = 0
    for n in nodes_per_graph:
        for j in range(n):
            a, b = off + j, off + (j + 1) % n
            edges.append((a, b))
            edges.append((b, a))
        off += n
    edge_index = jnp.asarray(edges, dtype=jnp.int32).T       # [2, E]

    key = jax.random.PRNGKey(0)
    key, kz, kp = jax.random.split(key, 3)
    z = jax.random.randint(kz, (num_nodes,), 0, max_z, dtype=jnp.int32)

    params = init_params(kp, hidden_channels, num_layers, max_z, k)
    packed = pack_params(params, hidden_channels, num_layers, k)

    out = dgcnn_forward(packed, z, edge_index, batch,
                        num_graphs=num_graphs, n_max=n_max, k=k,
                        hidden=hidden_channels, num_layers=num_layers)
    out = jax.block_until_ready(out)
    assert out.shape == (num_graphs, 1)
    print("KERNEL_OK")
</pallas_src>

<mosaic_0001>
module attributes {stable_mosaic.version = 11 : i64} {
  func.func private @main(%arg0: i32) attributes {dimension_semantics = [#tpu.dimension_semantics<core_parallel>], iteration_bounds = array<i64: 2>, tpu.core_type = #tpu.core_type<sc_scalar_subcore>, window_params = []} {
    return
  }
}

module attributes {stable_mosaic.version = 11 : i64} {
  func.func private @main(%arg0: i32) attributes {dimension_semantics = [#tpu.dimension_semantics<core_parallel>], iteration_bounds = array<i64: 2>, tpu.core_type = #tpu.core_type<sc_scalar_subcore>, window_params = []} {
    return
  }
}

module attributes {stable_mosaic.version = 11 : i64} {
  func.func @gcn_layer_kernel(%arg0: i32, %arg1: memref<16x32xbf16, #tpu.memory_space<vmem>>, %arg2: memref<32x32xf32, #tpu.memory_space<vmem>>, %arg3: memref<32x32xf32, #tpu.memory_space<vmem>>, %arg4: memref<1x32xf32, #tpu.memory_space<vmem>>, %arg5: memref<16x32xf32, #tpu.memory_space<vmem>>) attributes {dimension_semantics = [#tpu.dimension_semantics<parallel>], iteration_bounds = array<i64: 2>, scalar_prefetch = 0 : i64, scratch_operands = 0 : i64, tpu.core_type = #tpu.core_type<tc>, window_params = [{transform_indices = @transform_0, window_bounds = array<i64: 16, 32>}, {pipeline_mode = #tpu.pipeline_mode<synchronous>, transform_indices = @transform_1, window_bounds = array<i64: 32, 32>}, {pipeline_mode = #tpu.pipeline_mode<synchronous>, transform_indices = @transform_2, window_bounds = array<i64: 32, 32>}, {pipeline_mode = #tpu.pipeline_mode<synchronous>, transform_indices = @transform_3, window_bounds = array<i64: 1, 32>}, {transform_indices = @transform_4, window_bounds = array<i64: 16, 32>}]} {
    %c0 = arith.constant 0 : index
    %c0_0 = arith.constant 0 : index
    %0 = vector.load %arg2[%c0, %c0_0] : memref<32x32xf32, #tpu.memory_space<vmem>>, vector<32x32xf32>
    %c0_1 = arith.constant 0 : index
    %c0_2 = arith.constant 0 : index
    %1 = vector.load %arg3[%c0_1, %c0_2] : memref<32x32xf32, #tpu.memory_space<vmem>>, vector<32x32xf32>
    %cst = arith.constant dense<0.000000e+00> : vector<32x32xf32>
    %2 = tpu.matmul %0, %1, %cst {dimension_numbers = #tpu.dot_dimension_numbers<[1], [0], [0], [1], [0, 0, 1, 1], [], []>} : vector<32x32xf32>, vector<32x32xf32>, vector<32x32xf32> -> vector<32x32xf32>
    %c0_3 = arith.constant 0 : index
    %c0_4 = arith.constant 0 : index
    %3 = vector.load %arg1[%c0_3, %c0_4] : memref<16x32xbf16, #tpu.memory_space<vmem>>, vector<16x32xbf16>
    %4 = arith.truncf %2 : vector<32x32xf32> to vector<32x32xbf16>
    %cst_5 = arith.constant dense<0.000000e+00> : vector<16x32xf32>
    %5 = tpu.matmul %3, %4, %cst_5 {dimension_numbers = #tpu.dot_dimension_numbers<[1], [0], [0], [1], [0, 0, 1, 1], [], []>} : vector<16x32xbf16>, vector<32x32xbf16>, vector<16x32xf32> -> vector<16x32xf32>
    %c0_6 = arith.constant 0 : index
    %c0_7 = arith.constant 0 : index
    %6 = vector.load %arg4[%c0_6, %c0_7] : memref<1x32xf32, #tpu.memory_space<vmem>>, vector<1x32xf32>
    %7 = vector.broadcast %6 : vector<1x32xf32> to vector<16x32xf32>
    %8 = arith.addf %5, %7 : vector<16x32xf32>
    %9 = math.tanh %8 : vector<16x32xf32>
    %c0_8 = arith.constant 0 : index
    %c0_9 = arith.constant 0 : index
    %10 = vector.load %arg5[%c0_8, %c0_9] : memref<16x32xf32, #tpu.memory_space<vmem>>, vector<16x32xf32>
    tpu.vector_store %arg5[%c0_8, %c0_9], %9 {strides = array<i32>} : memref<16x32xf32, #tpu.memory_space<vmem>>, vector<16x32xf32>,
    return
  }
  func.func @transform_0(%arg0: i32) -> (i32, i32) {
    %c0_i32 = arith.constant 0 : i32
    %c0_i32_0 = arith.constant 0 : i32
    return %arg0, %c0_i32 : i32, i32
  }
  func.func @transform_1(%arg0: i32) -> (i32, i32) {
    %c0_i32 = arith.constant 0 : i32
    %c0_i32_0 = arith.constant 0 : i32
    %c0_i32_1 = arith.constant 0 : i32
    return %c0_i32, %c0_i32_0 : i32, i32
  }
  func.func @transform_2(%arg0: i32) -> (i32, i32) {
    %c0_i32 = arith.constant 0 : i32
    %c0_i32_0 = arith.constant 0 : i32
    %c0_i32_1 = arith.constant 0 : i32
    return %c0_i32, %c0_i32_0 : i32, i32
  }
  func.func @transform_3(%arg0: i32) -> (i32, i32) {
    %c0_i32 = arith.constant 0 : i32
    %c0_i32_0 = arith.constant 0 : i32
    %c0_i32_1 = arith.constant 0 : i32
    return %c0_i32, %c0_i32_0 : i32, i32
  }
  func.func @transform_4(%arg0: i32) -> (i32, i32) {
    %c0_i32 = arith.constant 0 : i32
    %c0_i32_0 = arith.constant 0 : i32
    return %arg0, %c0_i32 : i32, i32
  }
}

module attributes {stable_mosaic.version = 11 : i64} {
  func.func @gcn_final_kernel(%arg0: i32, %arg1: memref<16x32xbf16, #tpu.memory_space<vmem>>, %arg2: memref<32x32xf32, #tpu.memory_space<vmem>>, %arg3: memref<16x32xf32, #tpu.memory_space<vmem>>, %arg4: memref<16x32xf32, #tpu.memory_space<vmem>>, %arg5: memref<1x32xf32, #tpu.memory_space<vmem>>, %arg6: memref<1x1xf32, #tpu.memory_space<vmem>>, %arg7: memref<16x128xf32, #tpu.memory_space<vmem>>) attributes {dimension_semantics = [#tpu.dimension_semantics<parallel>], iteration_bounds = array<i64: 2>, scalar_prefetch = 0 : i64, scratch_operands = 0 : i64, tpu.core_type = #tpu.core_type<tc>, window_params = [{transform_indices = @transform_0, window_bounds = array<i64: 16, 32>}, {pipeline_mode = #tpu.pipeline_mode<synchronous>, transform_indices = @transform_1, window_bounds = array<i64: 32, 32>}, {transform_indices = @transform_2, window_bounds = array<i64: 16, 32>}, {transform_indices = @transform_3, window_bounds = array<i64: 16, 32>}, {pipeline_mode = #tpu.pipeline_mode<synchronous>, transform_indices = @transform_4, window_bounds = array<i64: 1, 32>}, {pipeline_mode = #tpu.pipeline_mode<synchronous>, transform_indices = @transform_5, window_bounds = array<i64: 1, 1>}, {transform_indices = @transform_6, window_bounds = array<i64: 16, 128>}]} {
    %c0 = arith.constant 0 : index
    %c0_0 = arith.constant 0 : index
    %0 = vector.load %arg1[%c0, %c0_0] : memref<16x32xbf16, #tpu.memory_space<vmem>>, vector<16x32xbf16>
    %c0_1 = arith.constant 0 : index
    %c0_2 = arith.constant 0 : index
    %1 = vector.load %arg2[%c0_1, %c0_2] : memref<32x32xf32, #tpu.memory_space<vmem>>, vector<32x32xf32>
    %2 = arith.truncf %1 : vector<32x32xf32> to vector<32x32xbf16>
    %cst = arith.constant dense<0.000000e+00> : vector<16x32xf32>
    %3 = tpu.matmul %0, %2, %cst {dimension_numbers = #tpu.dot_dimension_numbers<[1], [0], [0], [1], [0, 0, 1, 1], [], []>} : vector<16x32xbf16>, vector<32x32xbf16>, vector<16x32xf32> -> vector<16x32xf32>
    %c0_3 = arith.constant 0 : index
    %c0_4 = arith.constant 0 : index
    %4 = vector.load %arg5[%c0_3, %c0_4] : memref<1x32xf32, #tpu.memory_space<vmem>>, vector<1x32xf32>
    %5 = vector.broadcast %4 : vector<1x32xf32> to vector<16x32xf32>
    %6 = arith.mulf %3, %5 : vector<16x32xf32>
    %cst_5 = arith.constant dense<0.000000e+00> : vector<16xf32>
    %7 = vector.multi_reduction <add>, %6, %cst_5 [1] : vector<16x32xf32> to vector<16xf32>
    %8 = vector.shape_cast %7 : vector<16xf32> to vector<16x1xf32>
    %c0_6 = arith.constant 0 : index
    %c0_7 = arith.constant 0 : index
    %9 = vector.load %arg6[%c0_6, %c0_7] : memref<1x1xf32, #tpu.memory_space<vmem>>, vector<1x1xf32>
    %10 = vector.broadcast %9 : vector<1x1xf32> to vector<16x1xf32>
    %11 = arith.addf %8, %10 : vector<16x1xf32>
    %12 = math.tanh %11 : vector<16x1xf32>
    %c0_8 = arith.constant 0 : index
    %c0_9 = arith.constant 0 : index
    %13 = vector.load %arg3[%c0_8, %c0_9] : memref<16x32xf32, #tpu.memory_space<vmem>>, vector<16x32xf32>
    %c0_10 = arith.constant 0 : index
    %c0_11 = arith.constant 0 : index
    %14 = vector.load %arg4[%c0_10, %c0_11] : memref<16x32xf32, #tpu.memory_space<vmem>>, vector<16x32xf32>
    %cst_12 = arith.constant 0.000000e+00 : f32
    %15 = vector.broadcast %cst_12 : f32 to vector<16x63xf32>
    %16 = tpu.concatenate %13, %14, %12, %15 in 1 : vector<16x32xf32>, vector<16x32xf32>, vector<16x1xf32>, vector<16x63xf32> -> vector<16x128xf32>
    %c0_13 = arith.constant 0 : index
    %c0_14 = arith.constant 0 : index
    %17 = vector.load %arg7[%c0_13, %c0_14] : memref<16x128xf32, #tpu.memory_space<vmem>>, vector<16x128xf32>
    tpu.vector_store %arg7[%c0_13, %c0_14], %16 {strides = array<i32>} : memref<16x128xf32, #tpu.memory_space<vmem>>, vector<16x128xf32>,
    return
  }
  func.func @transform_0(%arg0: i32) -> (i32, i32) {
    %c0_i32 = arith.constant 0 : i32
    %c0_i32_0 = arith.constant 0 : i32
    return %arg0, %c0_i32 : i32, i32
  }
  func.func @transform_1(%arg0: i32) -> (i32, i32) {
    %c0_i32 = arith.constant 0 : i32
    %c0_i32_0 = arith.constant 0 : i32
    %c0_i32_1 = arith.constant 0 : i32
    return %c0_i32, %c0_i32_0 : i32, i32
  }
  func.func @transform_2(%arg0: i32) -> (i32, i32) {
    %c0_i32 = arith.constant 0 : i32
    %c0_i32_0 = arith.constant 0 : i32
    return %arg0, %c0_i32 : i32, i32
  }
  func.func @transform_3(%arg0: i32) -> (i32, i32) {
    %c0_i32 = arith.constant 0 : i32
    %c0_i32_0 = arith.constant 0 : i32
    return %arg0, %c0_i32 : i32, i32
  }
  func.func @transform_4(%arg0: i32) -> (i32, i32) {
    %c0_i32 = arith.constant 0 : i32
    %c0_i32_0 = arith.constant 0 : i32
    %c0_i32_1 = arith.constant 0 : i32
    return %c0_i32, %c0_i32_0 : i32, i32
  }
  func.func @transform_5(%arg0: i32) -> (i32, i32) {
    %c0_i32 = arith.constant 0 : i32
    %c0_i32_0 = arith.constant 0 : i32
    %c0_i32_1 = arith.constant 0 : i32
    return %c0_i32, %c0_i32_0 : i32, i32
  }
  func.func @transform_6(%arg0: i32) -> (i32, i32) {
    %c0_i32 = arith.constant 0 : i32
    %c0_i32_0 = arith.constant 0 : i32
    return %arg0, %c0_i32 : i32, i32
  }
}

module attributes {stable_mosaic.version = 11 : i64} {
  func.func @head_kernel(%arg0: i32, %arg1: memref<1x10x128xf32, #tpu.memory_space<vmem>>, %arg2: memref<128x16xf32, #tpu.memory_space<vmem>>, %arg3: memref<1x16xf32, #tpu.memory_space<vmem>>, %arg4: memref<5x16x32xf32, #tpu.memory_space<vmem>>, %arg5: memref<1x32xf32, #tpu.memory_space<vmem>>, %arg6: memref<1x32x128xf32, #tpu.memory_space<vmem>>, %arg7: memref<1x128xf32, #tpu.memory_space<vmem>>, %arg8: memref<1x128xf32, #tpu.memory_space<vmem>>, %arg9: memref<1x1xf32, #tpu.memory_space<vmem>>, %arg10: memref<1x1x128xf32, #tpu.memory_space<vmem>>) attributes {dimension_semantics = [#tpu.dimension_semantics<parallel>], iteration_bounds = array<i64: 2>, scalar_prefetch = 0 : i64, scratch_operands = 0 : i64, tpu.core_type = #tpu.core_type<tc>, window_params = [{transform_indices = @transform_0, window_bounds = array<i64: 1, 10, 128>}, {pipeline_mode = #tpu.pipeline_mode<synchronous>, transform_indices = @transform_1, window_bounds = array<i64: 128, 16>}, {pipeline_mode = #tpu.pipeline_mode<synchronous>, transform_indices = @transform_2, window_bounds = array<i64: 1, 16>}, {pipeline_mode = #tpu.pipeline_mode<synchronous>, transform_indices = @transform_3, window_bounds = array<i64: 5, 16, 32>}, {pipeline_mode = #tpu.pipeline_mode<synchronous>, transform_indices = @transform_4, window_bounds = array<i64: 1, 32>}, {pipeline_mode = #tpu.pipeline_mode<synchronous>, transform_indices = @transform_5, window_bounds = array<i64: 1, 32, 128>}, {pipeline_mode = #tpu.pipeline_mode<synchronous>, transform_indices = @transform_6, window_bounds = array<i64: 1, 128>}, {pipeline_mode = #tpu.pipeline_mode<synchronous>, transform_indices = @transform_7, window_bounds = array<i64: 1, 128>}, {pipeline_mode = #tpu.pipeline_mode<synchronous>, transform_indices = @transform_8, window_bounds = array<i64: 1, 1>}, {transform_indices = @transform_9, window_bounds = array<i64: 1, 1, 128>}]} {
    %c0 = arith.constant 0 : index
    %c0_0 = arith.constant 0 : index
    %c0_1 = arith.constant 0 : index
    %0 = vector.load %arg1[%c0, %c0_0, %c0_1] : memref<1x10x128xf32, #tpu.memory_space<vmem>>, vector<1x10x128xf32>
    %1 = vector.shape_cast %0 : vector<1x10x128xf32> to vector<10x128xf32>
    %c0_2 = arith.constant 0 : index
    %c0_3 = arith.constant 0 : index
    %2 = vector.load %arg2[%c0_2, %c0_3] : memref<128x16xf32, #tpu.memory_space<vmem>>, vector<128x16xf32>
    %cst = arith.constant dense<0.000000e+00> : vector<10x16xf32>
    %3 = tpu.matmul %1, %2, %cst {dimension_numbers = #tpu.dot_dimension_numbers<[1], [0], [0], [1], [0, 0, 1, 1], [], []>} : vector<10x128xf32>, vector<128x16xf32>, vector<10x16xf32> -> vector<10x16xf32>
    %c0_4 = arith.constant 0 : index
    %c0_5 = arith.constant 0 : index
    %4 = vector.load %arg3[%c0_4, %c0_5] : memref<1x16xf32, #tpu.memory_space<vmem>>, vector<1x16xf32>
    %5 = vector.broadcast %4 : vector<1x16xf32> to vector<10x16xf32>
    %6 = arith.addf %3, %5 : vector<10x16xf32>
    %cst_6 = arith.constant 0.000000e+00 : f32
    %7 = vector.broadcast %cst_6 : f32 to vector<10x16xf32>
    %8 = arith.maximumf %6, %7 : vector<10x16xf32>
    %9 = vector.extract_strided_slice %8 {offsets = [0, 0], sizes = [1, 16], strides = [1, 1]} : vector<10x16xf32> to vector<1x16xf32>
    %10 = vector.extract_strided_slice %8 {offsets = [1, 0], sizes = [1, 16], strides = [1, 1]} : vector<10x16xf32> to vector<1x16xf32>
    %11 = arith.maximumf %9, %10 : vector<1x16xf32>
    %12 = vector.extract_strided_slice %8 {offsets = [2, 0], sizes = [1, 16], strides = [1, 1]} : vector<10x16xf32> to vector<1x16xf32>
    %13 = vector.extract_strided_slice %8 {offsets = [3, 0], sizes = [1, 16], strides = [1, 1]} : vector<10x16xf32> to vector<1x16xf32>
    %14 = arith.maximumf %12, %13 : vector<1x16xf32>
    %15 = vector.extract_strided_slice %8 {offsets = [4, 0], sizes = [1, 16], strides = [1, 1]} : vector<10x16xf32> to vector<1x16xf32>
    %16 = vector.extract_strided_slice %8 {offsets = [5, 0], sizes = [1, 16], strides = [1, 1]} : vector<10x16xf32> to vector<1x16xf32>
    %17 = arith.maximumf %15, %16 : vector<1x16xf32>
    %18 = vector.extract_strided_slice %8 {offsets = [6, 0], sizes = [1, 16], strides = [1, 1]} : vector<10x16xf32> to vector<1x16xf32>
    %19 = vector.extract_strided_slice %8 {offsets = [7, 0], sizes = [1, 16], strides = [1, 1]} : vector<10x16xf32> to vector<1x16xf32>
    %20 = arith.maximumf %18, %19 : vector<1x16xf32>
    %21 = vector.extract_strided_slice %8 {offsets = [8, 0], sizes = [1, 16], strides = [1, 1]} : vector<10x16xf32> to vector<1x16xf32>
    %22 = vector.extract_strided_slice %8 {offsets = [9, 0], sizes = [1, 16], strides = [1, 1]} : vector<10x16xf32> to vector<1x16xf32>
    %23 = arith.maximumf %21, %22 : vector<1x16xf32>
    %24 = tpu.concatenate %11, %14, %17, %20, %23 in 0 : vector<1x16xf32>, vector<1x16xf32>, vector<1x16xf32>, vector<1x16xf32>, vector<1x16xf32> -> vector<5x16xf32>
    %c0_7 = arith.constant 0 : index
    %c0_8 = arith.constant 0 : index
    %25 = vector.load %arg5[%c0_7, %c0_8] : memref<1x32xf32, #tpu.memory_space<vmem>>, vector<1x32xf32>
    %26 = vector.extract_strided_slice %24 {offsets = [0, 0], sizes = [1, 16], strides = [1, 1]} : vector<5x16xf32> to vector<1x16xf32>
    %c0_9 = arith.constant 0 : index
    %c0_10 = arith.constant 0 : index
    %c0_11 = arith.constant 0 : index
    %27 = vector.load %arg4[%c0_9, %c0_10, %c0_11] : memref<5x16x32xf32, #tpu.memory_space<vmem>>, vector<1x16x32xf32>
    %28 = vector.shape_cast %27 : vector<1x16x32xf32> to vector<16x32xf32>
    %cst_12 = arith.constant dense<0.000000e+00> : vector<1x32xf32>
    %29 = tpu.matmul %26, %28, %cst_12 {dimension_numbers = #tpu.dot_dimension_numbers<[1], [0], [0], [1], [0, 0, 1, 1], [], []>} : vector<1x16xf32>, vector<16x32xf32>, vector<1x32xf32> -> vector<1x32xf32>
    %30 = arith.addf %25, %29 : vector<1x32xf32>
    %31 = vector.extract_strided_slice %24 {offsets = [1, 0], sizes = [1, 16], strides = [1, 1]} : vector<5x16xf32> to vector<1x16xf32>
    %c1 = arith.constant 1 : index
    %c0_13 = arith.constant 0 : index
    %c0_14 = arith.constant 0 : index
    %32 = vector.load %arg4[%c1, %c0_13, %c0_14] : memref<5x16x32xf32, #tpu.memory_space<vmem>>, vector<1x16x32xf32>
    %33 = vector.shape_cast %32 : vector<1x16x32xf32> to vector<16x32xf32>
    %cst_15 = arith.constant dense<0.000000e+00> : vector<1x32xf32>
    %34 = tpu.matmul %31, %33, %cst_15 {dimension_numbers = #tpu.dot_dimension_numbers<[1], [0], [0], [1], [0, 0, 1, 1], [], []>} : vector<1x16xf32>, vector<16x32xf32>, vector<1x32xf32> -> vector<1x32xf32>
    %35 = arith.addf %30, %34 : vector<1x32xf32>
    %36 = vector.extract_strided_slice %24 {offsets = [2, 0], sizes = [1, 16], strides = [1, 1]} : vector<5x16xf32> to vector<1x16xf32>
    %c2 = arith.constant 2 : index
    %c0_16 = arith.constant 0 : index
    %c0_17 = arith.constant 0 : index
    %37 = vector.load %arg4[%c2, %c0_16, %c0_17] : memref<5x16x32xf32, #tpu.memory_space<vmem>>, vector<1x16x32xf32>
    %38 = vector.shape_cast %37 : vector<1x16x32xf32> to vector<16x32xf32>
    %cst_18 = arith.constant dense<0.000000e+00> : vector<1x32xf32>
    %39 = tpu.matmul %36, %38, %cst_18 {dimension_numbers = #tpu.dot_dimension_numbers<[1], [0], [0], [1], [0, 0, 1, 1], [], []>} : vector<1x16xf32>, vector<16x32xf32>, vector<1x32xf32> -> vector<1x32xf32>
    %40 = arith.addf %35, %39 : vector<1x32xf32>
    %41 = vector.extract_strided_slice %24 {offsets = [3, 0], sizes = [1, 16], strides = [1, 1]} : vector<5x16xf32> to vector<1x16xf32>
    %c3 = arith.constant 3 : index
    %c0_19 = arith.constant 0 : index
    %c0_20 = arith.constant 0 : index
    %42 = vector.load %arg4[%c3, %c0_19, %c0_20] : memref<5x16x32xf32, #tpu.memory_space<vmem>>, vector<1x16x32xf32>
    %43 = vector.shape_cast %42 : vector<1x16x32xf32> to vector<16x32xf32>
    %cst_21 = arith.constant dense<0.000000e+00> : vector<1x32xf32>
    %44 = tpu.matmul %41, %43, %cst_21 {dimension_numbers = #tpu.dot_dimension_numbers<[1], [0], [0], [1], [0, 0, 1, 1], [], []>} : vector<1x16xf32>, vector<16x32xf32>, vector<1x32xf32> -> vector<1x32xf32>
    %45 = arith.addf %40, %44 : vector<1x32xf32>
    %46 = vector.extract_strided_slice %24 {offsets = [4, 0], sizes = [1, 16], strides = [1, 1]} : vector<5x16xf32> to vector<1x16xf32>
    %c4 = arith.constant 4 : index
    %c0_22 = arith.constant 0 : index
    %c0_23 = arith.constant 0 : index
    %47 = vector.load %arg4[%c4, %c0_22, %c0_23] : memref<5x16x32xf32, #tpu.memory_space<vmem>>, vector<1x16x32xf32>
    %48 = vector.shape_cast %47 : vector<1x16x32xf32> to vector<16x32xf32>
    %cst_24 = arith.constant dense<0.000000e+00> : vector<1x32xf32>
    %49 = tpu.matmul %46, %48, %cst_24 {dimension_numbers = #tpu.dot_dimension_numbers<[1], [0], [0], [1], [0, 0, 1, 1], [], []>} : vector<1x16xf32>, vector<16x32xf32>, vector<1x32xf32> -> vector<1x32xf32>
    %50 = arith.addf %45, %49 : vector<1x32xf32>
    %cst_25 = arith.constant 0.000000e+00 : f32
    %51 = vector.broadcast %cst_25 : f32 to vector<1x32xf32>
    %52 = arith.maximumf %50, %51 : vector<1x32xf32>
    %c0_26 = arith.constant 0 : index
    %c0_27 = arith.constant 0 : index
    %53 = vector.load %arg7[%c0_26, %c0_27] : memref<1x128xf32, #tpu.memory_space<vmem>>, vector<1x128xf32>
    %c0_28 = arith.constant 0 : index
    %c0_29 = arith.constant 0 : index
    %c0_30 = arith.constant 0 : index
    %54 = vector.load %arg6[%c0_28, %c0_29, %c0_30] : memref<1x32x128xf32, #tpu.memory_space<vmem>>, vector<1x32x128xf32>
    %55 = vector.shape_cast %54 : vector<1x32x128xf32> to vector<32x128xf32>
    %cst_31 = arith.constant dense<0.000000e+00> : vector<1x128xf32>
    %56 = tpu.matmul %52, %55, %cst_31 {dimension_numbers = #tpu.dot_dimension_numbers<[1], [0], [0], [1], [0, 0, 1, 1], [], []>} : vector<1x32xf32>, vector<32x128xf32>, vector<1x128xf32> -> vector<1x128xf32>
    %57 = arith.addf %53, %56 : vector<1x128xf32>
    %cst_32 = arith.constant 0.000000e+00 : f32
    %58 = vector.broadcast %cst_32 : f32 to vector<1x128xf32>
    %59 = arith.maximumf %57, %58 : vector<1x128xf32>
    %c0_33 = arith.constant 0 : index
    %c0_34 = arith.constant 0 : index
    %60 = vector.load %arg8[%c0_33, %c0_34] : memref<1x128xf32, #tpu.memory_space<vmem>>, vector<1x128xf32>
    %61 = arith.mulf %59, %60 : vector<1x128xf32>
    %cst_35 = arith.constant dense<0.000000e+00> : vector<1xf32>
    %62 = vector.multi_reduction <add>, %61, %cst_35 [1] : vector<1x128xf32> to vector<1xf32>
    %63 = vector.shape_cast %62 : vector<1xf32> to vector<1x1xf32>
    %c0_36 = arith.constant 0 : index
    %c0_37 = arith.constant 0 : index
    %64 = vector.load %arg9[%c0_36, %c0_37] : memref<1x1xf32, #tpu.memory_space<vmem>>, vector<1x1xf32>
    %65 = arith.addf %63, %64 : vector<1x1xf32>
    %cst_38 = arith.constant 0.000000e+00 : f32
    %66 = vector.broadcast %cst_38 : f32 to vector<1x127xf32>
    %67 = tpu.concatenate %65, %66 in 1 : vector<1x1xf32>, vector<1x127xf32> -> vector<1x128xf32>
    %68 = vector.shape_cast %67 : vector<1x128xf32> to vector<1x1x128xf32>
    %c0_39 = arith.constant 0 : index
    %c0_40 = arith.constant 0 : index
    %c0_41 = arith.constant 0 : index
    %69 = vector.load %arg10[%c0_39, %c0_40, %c0_41] : memref<1x1x128xf32, #tpu.memory_space<vmem>>, vector<1x1x128xf32>
    tpu.vector_store %arg10[%c0_39, %c0_40, %c0_41], %68 {strides = array<i32>} : memref<1x1x128xf32, #tpu.memory_space<vmem>>, vector<1x1x128xf32>,
    return
  }
  func.func @transform_0(%arg0: i32) -> (i32, i32, i32) {
    %c0_i32 = arith.constant 0 : i32
    %c0_i32_0 = arith.constant 0 : i32
    %c0_i32_1 = arith.constant 0 : i32
    return %arg0, %c0_i32, %c0_i32_0 : i32, i32, i32
  }
  func.func @transform_1(%arg0: i32) -> (i32, i32) {
    %c0_i32 = arith.constant 0 : i32
    %c0_i32_0 = arith.constant 0 : i32
    %c0_i32_1 = arith.constant 0 : i32
    return %c0_i32, %c0_i32_0 : i32, i32
  }
  func.func @transform_2(%arg0: i32) -> (i32, i32) {
    %c0_i32 = arith.constant 0 : i32
    %c0_i32_0 = arith.constant 0 : i32
    %c0_i32_1 = arith.constant 0 : i32
    return %c0_i32, %c0_i32_0 : i32, i32
  }
  func.func @transform_3(%arg0: i32) -> (i32, i32, i32) {
    %c0_i32 = arith.constant 0 : i32
    %c0_i32_0 = arith.constant 0 : i32
    %c0_i32_1 = arith.constant 0 : i32
    %c0_i32_2 = arith.constant 0 : i32
    return %c0_i32, %c0_i32_0, %c0_i32_1 : i32, i32, i32
  }
  func.func @transform_4(%arg0: i32) -> (i32, i32) {
    %c0_i32 = arith.constant 0 : i32
    %c0_i32_0 = arith.constant 0 : i32
    %c0_i32_1 = arith.constant 0 : i32
    return %c0_i32, %c0_i32_0 : i32, i32
  }
  func.func @transform_5(%arg0: i32) -> (i32, i32, i32) {
    %c0_i32 = arith.constant 0 : i32
    %c0_i32_0 = arith.constant 0 : i32
    %c0_i32_1 = arith.constant 0 : i32
    %c0_i32_2 = arith.constant 0 : i32
    return %c0_i32, %c0_i32_0, %c0_i32_1 : i32, i32, i32
  }
  func.func @transform_6(%arg0: i32) -> (i32, i32) {
    %c0_i32 = arith.constant 0 : i32
    %c0_i32_0 = arith.constant 0 : i32
    %c0_i32_1 = arith.constant 0 : i32
    return %c0_i32, %c0_i32_0 : i32, i32
  }
  func.func @transform_7(%arg0: i32) -> (i32, i32) {
    %c0_i32 = arith.constant 0 : i32
    %c0_i32_0 = arith.constant 0 : i32
    %c0_i32_1 = arith.constant 0 : i32
    return %c0_i32, %c0_i32_0 : i32, i32
  }
  func.func @transform_8(%arg0: i32) -> (i32, i32) {
    %c0_i32 = arith.constant 0 : i32
    %c0_i32_0 = arith.constant 0 : i32
    %c0_i32_1 = arith.constant 0 : i32
    return %c0_i32, %c0_i32_0 : i32, i32
  }
  func.func @transform_9(%arg0: i32) -> (i32, i32, i32) {
    %c0_i32 = arith.constant 0 : i32
    %c0_i32_0 = arith.constant 0 : i32
    %c0_i32_1 = arith.constant 0 : i32
    return %arg0, %c0_i32, %c0_i32_0 : i32, i32, i32
  }
}

</mosaic_0001>

<llo_original>
// kernel: dgcnn_forward.6
$region0: #{dgcnn_forward.6}
  #allocation0 [shape = 'u32[]', space=smem, size = 0x4, offset = 0x4, fixed_abs, tag = 'smem constant byte address 0x4 - core index']
  #allocation1 [shape = 'u32[144,128]{1,0:T(1,128)}', space=vmem, size = 0x12000, scoped, tag = 'internal scratch']
  #allocation2 [shape = 'f32[1,1]{1,0:T(1,128)S(1)}', space=vmem, size = 0x200, scoped, tag = 'scoped memory for dgcnn_forward.6']
  %s0 = inlined_call_operand.vmem [shape: bf16[32,32], index: 0, kind: input, shape index: {}]
  %s1 = inlined_call_operand.vmem [shape: f32[32,32], index: 1, kind: input, shape index: {}, may-alias: {1,3}]
  %s2 = inlined_call_operand.vmem [shape: f32[32,32], index: 2, kind: input, shape index: {}]
  %s3 = inlined_call_operand.vmem [shape: f32[32,32], index: 3, kind: input, shape index: {}, may-alias: {1,3}]
  %s4 = inlined_call_operand.vmem [shape: f32[1,32], index: 4, kind: input, shape index: {}]
  %s5 = inlined_call_operand.<no memory space> [shape: f32[1,1], index: 5, kind: input, shape index: {}]
  %s6 = inlined_call_operand.vmem [shape: f32[32,128], index: 6, kind: output, shape index: {}]
  %s7 = sld [smem:[#allocation0]]
  $region57: #{dgcnn_forward.6} parent=0
    _
  %s9 = ssub.s32 1, %s7
  %s10 = scalar_select 0, %s9, %s7
  %v11 = vstv %s5
  %12 = vst [vmem:[#allocation2] sm:$0x1] %v11
  loop: start=0, step=1, limit=4
  $region2: #{dgcnn_forward.6} parent=0 // loop_pre_header
    _
  $region3: #{dgcnn_forward.6} parent=0 // loop_header
    %s14 = sphi 0, %s18
    %p15 = scmp.ge.s32.totalorder %s14, 4
    %s24 = sphi 0, %s26
    %s27 = sphi 0, %s24
    %s28 = sphi 0, %s27
    %s44 = sphi 0, %s28
    %s48 = sphi 0, %s48
    %s50 = sphi 0, %s48
    %s51 = sphi 0, %s50
    %s65 = sphi 0, %s51
    %s71 = sphi 0, %s73
    %s74 = sphi 0, %s71
    %s75 = sphi 0, %s74
    %s91 = sphi 0, %s75
    %s97 = sphi 0, %s99
    %s100 = sphi 0, %s97
    %s101 = sphi 0, %s100
    %s117 = sphi 0, %s101
    %s121 = sphi 0, %s121
    %s123 = sphi 0, %s121
    %s124 = sphi 0, %s123
    %s138 = sphi 0, %s124
    %s142 = sphi 0, %s142
    %s144 = sphi 0, %s142
    %s145 = sphi 0, %s144
    %s159 = sphi 0, %s145
    %s165 = sphi 0, %s167
    %s168 = sphi 0, %s165
    %s169 = sphi 0, %s168
    %s185 = sphi 0, %s169
  $region4: #{dgcnn_forward.6} parent=0 // loop_header_branch
    %17 = sbr.rel (%p15) target = $region8
  $region5: #{dgcnn_forward.6} parent=0 // loop_body
    %s19 = ssub.s32 %s14, 1
    %s20 = ssub.s32 %s14, 2
    %s21 = sadd.s32 %s14, 1
    %s22 = ssub.s32 %s14, %s21
    %p23 = scmp.eq.s32.totalorder %s22, 0
    %s25 = sadd.s32 %s24, 1
    %s26 = scalar_select %p23, %s24, %s25
    %p29 = pneg %p23
    %p30 = scmp.eq.s32.totalorder %s14, 1
    %p31 = por %p29, %p30
    %p32 = scmp.ne.s32.totalorder %s24, %s27
    %p33 = scmp.eq.s32.totalorder %s14, 0
    %p34 = por %p32, %p33
    %p35 = scmp.ne.s32.totalorder %s24, %s27
    %p36 = scmp.eq.s32.totalorder %s19, 1
    %p37 = por %p35, %p36
    %p38 = scmp.ne.s32.totalorder %s27, %s28
    %p39 = scmp.eq.s32.totalorder %s19, 0
    %p40 = por %p38, %p39
    %p41 = scmp.ne.s32.totalorder %s27, %s28
    %p42 = scmp.eq.s32.totalorder %s20, 1
    %p43 = por %p41, %p42
    %p45 = scmp.ne.s32.totalorder %s28, %s44
    %p46 = scmp.eq.s32.totalorder %s20, 0
    %p47 = por %p45, %p46
    %s49 = sadd.s32 %s48, 1
    %p52 = scmp.eq.s32.totalorder %s14, 1
    %p53 = scmp.ne.s32.totalorder %s48, %s50
    %p54 = scmp.eq.s32.totalorder %s14, 0
    %p55 = por %p53, %p54
    %p56 = scmp.ne.s32.totalorder %s48, %s50
    %p57 = scmp.eq.s32.totalorder %s19, 1
    %p58 = por %p56, %p57
    %p59 = scmp.ne.s32.totalorder %s50, %s51
    %p60 = scmp.eq.s32.totalorder %s19, 0
    %p61 = por %p59, %p60
    %p62 = scmp.ne.s32.totalorder %s50, %s51
    %p63 = scmp.eq.s32.totalorder %s20, 1
    %p64 = por %p62, %p63
    %p66 = scmp.ne.s32.totalorder %s51, %s65
    %p67 = scmp.eq.s32.totalorder %s20, 0
    %p68 = por %p66, %p67
    %s69 = ssub.s32 %s14, %s21
    %p70 = scmp.eq.s32.totalorder %s69, 0
    %s72 = sadd.s32 %s71, 1
    %s73 = scalar_select %p70, %s71, %s72
    %p76 = pneg %p70
    %p77 = scmp.eq.s32.totalorder %s14, 1
    %p78 = por %p76, %p77
    %p79 = scmp.ne.s32.totalorder %s71, %s74
    %p80 = scmp.eq.s32.totalorder %s14, 0
    %p81 = por %p79, %p80
    %p82 = scmp.ne.s32.totalorder %s71, %s74
    %p83 = scmp.eq.s32.totalorder %s19, 1
    %p84 = por %p82, %p83
    %p85 = scmp.ne.s32.totalorder %s74, %s75
    %p86 = scmp.eq.s32.totalorder %s19, 0
    %p87 = por %p85, %p86
    %p88 = scmp.ne.s32.totalorder %s74, %s75
    %p89 = scmp.eq.s32.totalorder %s20, 1
    %p90 = por %p88, %p89
    %p92 = scmp.ne.s32.totalorder %s75, %s91
    %p93 = scmp.eq.s32.totalorder %s20, 0
    %p94 = por %p92, %p93
    %s95 = ssub.s32 %s14, %s21
    %p96 = scmp.eq.s32.totalorder %s95, 0
    %s98 = sadd.s32 %s97, 1
    %s99 = scalar_select %p96, %s97, %s98
    %p102 = pneg %p96
    %p103 = scmp.eq.s32.totalorder %s14, 1
    %p104 = por %p102, %p103
    %p105 = scmp.ne.s32.totalorder %s97, %s100
    %p106 = scmp.eq.s32.totalorder %s14, 0
    %p107 = por %p105, %p106
    %p108 = scmp.ne.s32.totalorder %s97, %s100
    %p109 = scmp.eq.s32.totalorder %s19, 1
    %p110 = por %p108, %p109
    %p111 = scmp.ne.s32.totalorder %s100, %s101
    %p112 = scmp.eq.s32.totalorder %s19, 0
    %p113 = por %p111, %p112
    %p114 = scmp.ne.s32.totalorder %s100, %s101
    %p115 = scmp.eq.s32.totalorder %s20, 1
    %p116 = por %p114, %p115
    %p118 = scmp.ne.s32.totalorder %s101, %s117
    %p119 = scmp.eq.s32.totalorder %s20, 0
    %p120 = por %p118, %p119
    %s122 = sadd.s32 %s121, 1
    %p125 = scmp.eq.s32.totalorder %s14, 1
    %p126 = scmp.ne.s32.totalorder %s121, %s123
    %p127 = scmp.eq.s32.totalorder %s14, 0
    %p128 = por %p126, %p127
    %p129 = scmp.ne.s32.totalorder %s121, %s123
    %p130 = scmp.eq.s32.totalorder %s19, 1
    %p131 = por %p129, %p130
    %p132 = scmp.ne.s32.totalorder %s123, %s124
    %p133 = scmp.eq.s32.totalorder %s19, 0
    %p134 = por %p132, %p133
    %p135 = scmp.ne.s32.totalorder %s123, %s124
    %p136 = scmp.eq.s32.totalorder %s20, 1
    %p137 = por %p135, %p136
    %p139 = scmp.ne.s32.totalorder %s124, %s138
    %p140 = scmp.eq.s32.totalorder %s20, 0
    %p141 = por %p139, %p140
    %s143 = sadd.s32 %s142, 1
    %p146 = scmp.eq.s32.totalorder %s14, 1
    %p147 = scmp.ne.s32.totalorder %s142, %s144
    %p148 = scmp.eq.s32.totalorder %s14, 0
    %p149 = por %p147, %p148
    %p150 = scmp.ne.s32.totalorder %s142, %s144
    %p151 = scmp.eq.s32.totalorder %s19, 1
    %p152 = por %p150, %p151
    %p153 = scmp.ne.s32.totalorder %s144, %s145
    %p154 = scmp.eq.s32.totalorder %s19, 0
    %p155 = por %p153, %p154
    %p156 = scmp.ne.s32.totalorder %s144, %s145
    %p157 = scmp.eq.s32.totalorder %s20, 1
    %p158 = por %p156, %p157
    %p160 = scmp.ne.s32.totalorder %s145, %s159
    %p161 = scmp.eq.s32.totalorder %s20, 0
    %p162 = por %p160, %p161
    %s163 = ssub.s32 %s14, %s21
    %p164 = scmp.eq.s32.totalorder %s163, 0
    %s166 = sadd.s32 %s165, 1
    %s167 = scalar_select %p164, %s165, %s166
    %p170 = pneg %p164
    %p171 = scmp.eq.s32.totalorder %s14, 1
    %p172 = por %p170, %p171
    %p173 = scmp.ne.s32.totalorder %s165, %s168
    %p174 = scmp.eq.s32.totalorder %s14, 0
    %p175 = por %p173, %p174
    %p176 = scmp.ne.s32.totalorder %s165, %s168
    %p177 = scmp.eq.s32.totalorder %s19, 1
    %p178 = por %p176, %p177
    %p179 = scmp.ne.s32.totalorder %s168, %s169
    %p180 = scmp.eq.s32.totalorder %s19, 0
    %p181 = por %p179, %p180
    %p182 = scmp.ne.s32.totalorder %s168, %s169
    %p183 = scmp.eq.s32.totalorder %s20, 1
    %p184 = por %p182, %p183
    %p186 = scmp.ne.s32.totalorder %s169, %s185
    %p187 = scmp.eq.s32.totalorder %s20, 0
    %p188 = por %p186, %p187
    %p189 = scmp.le.s32.totalorder 1, %s14
    %p190 = scmp.lt.s32.totalorder %s14, 3
    %p191 = pnand %p189, %p190
    %p192 = pneg %p191
    // Predicated region
    $region9: #{dgcnn_forward.6} parent=5 // pred_check
      _
    $region10: #{dgcnn_forward.6} parent=5 // pred_check_branch
      %194 = sbr.rel (%p191) target = $region12
    $region11: #{dgcnn_forward.6} parent=5 // pred_region
      %s195 = ssub.s32 %s14, 1
      // Predicated region
      $region13: #{dgcnn_forward.6} parent=11 // pred_check
        %p196 = pneg %p61
      $region14: #{dgcnn_forward.6} parent=11 // pred_check_branch
        %198 = sbr.rel (%p196) target = $region16
      $region15: #{dgcnn_forward.6} parent=11 // pred_region
        _
      $region16: #{dgcnn_forward.6} parent=11 // pred_fallthru
        _
      // Predicated region
      $region17: #{dgcnn_forward.6} parent=11 // pred_check
        %p199 = pneg %p134
      $region18: #{dgcnn_forward.6} parent=11 // pred_check_branch
        %201 = sbr.rel (%p199) target = $region20
      $region19: #{dgcnn_forward.6} parent=11 // pred_region
        _
      $region20: #{dgcnn_forward.6} parent=11 // pred_fallthru
        _
      // Predicated region
      $region21: #{dgcnn_forward.6} parent=11 // pred_check
        %p202 = pneg %p155
      $region22: #{dgcnn_forward.6} parent=11 // pred_check_branch
        %204 = sbr.rel (%p202) target = $region24
      $region23: #{dgcnn_forward.6} parent=11 // pred_region
        _
      $region24: #{dgcnn_forward.6} parent=11 // pred_fallthru
        _
    $region12: #{dgcnn_forward.6} parent=5 // pred_fallthru
      _
    %p205 = scmp.lt.s32.totalorder %s14, 2
    // Predicated region
    $region25: #{dgcnn_forward.6} parent=5 // pred_check
      %p206 = pneg %p205
    $region26: #{dgcnn_forward.6} parent=5 // pred_check_branch
      %208 = sbr.rel (%p206) target = $region28
    $region27: #{dgcnn_forward.6} parent=5 // pred_region
      // Predicated region
      $region29: #{dgcnn_forward.6} parent=27 // pred_check
        %p209 = pneg %p34
      $region30: #{dgcnn_forward.6} parent=27 // pred_check_branch
        %211 = sbr.rel (%p209) target = $region32
      $region31: #{dgcnn_forward.6} parent=27 // pred_region
        %s212 = smul.u32 2, %s14
        %p213 = scmp.lt.s32.totalorder %s212, 3
        %s214 = scalar_select %p213, %s212, 3
        %s215 = smul.addr %s214, 4
        %s216 = scalar_lea.vmem %s0, %s215
        %s217 = smul.u32 2, %s14
      $region32: #{dgcnn_forward.6} parent=27 // pred_fallthru
        _
      // Predicated region
      $region33: #{dgcnn_forward.6} parent=27 // pred_check
        %p218 = pneg %p81
      $region34: #{dgcnn_forward.6} parent=27 // pred_check_branch
        %220 = sbr.rel (%p218) target = $region36
      $region35: #{dgcnn_forward.6} parent=27 // pred_region
        %s221 = smul.u32 2, %s14
        %p222 = scmp.lt.s32.totalorder %s221, 3
        %s223 = scalar_select %p222, %s221, 3
        %s224 = smul.addr %s223, 8
        %s225 = scalar_lea.vmem %s2, %s224
        %s226 = smul.u32 2, %s14
      $region36: #{dgcnn_forward.6} parent=27 // pred_fallthru
        _
      // Predicated region
      $region37: #{dgcnn_forward.6} parent=27 // pred_check
        %p227 = pneg %p107
      $region38: #{dgcnn_forward.6} parent=27 // pred_check_branch
        %229 = sbr.rel (%p227) target = $region40
      $region39: #{dgcnn_forward.6} parent=27 // pred_region
        %s230 = smul.u32 2, %s14
        %p231 = scmp.lt.s32.totalorder %s230, 3
        %s232 = scalar_select %p231, %s230, 3
        %s233 = smul.addr %s232, 8
        %s234 = scalar_lea.vmem %s3, %s233
        %s235 = smul.u32 2, %s14
      $region40: #{dgcnn_forward.6} parent=27 // pred_fallthru
        _
    $region28: #{dgcnn_forward.6} parent=5 // pred_fallthru
      _
    %p236 = scmp.le.s32.totalorder 1, %s14
    %p237 = scmp.lt.s32.totalorder %s14, 3
    %p238 = pnand %p236, %p237
    %p239 = pneg %p238
    // Predicated region
    $region41: #{dgcnn_forward.6} parent=5 // pred_check
      _
    $region42: #{dgcnn_forward.6} parent=5 // pred_check_branch
      %241 = sbr.rel (%p238) target = $region44
    $region43: #{dgcnn_forward.6} parent=5 // pred_region
      %s242 = ssub.s32 %s14, 1
      %s243 = smul.u32 2, %s19
      %p244 = scmp.lt.s32.totalorder %s243, 3
      %s245 = scalar_select %p244, %s243, 3
      %s246 = smul.addr %s245, 4
      %s247 = scalar_lea.vmem %s0, %s246
      %p248 = pneg %p40
      %p249 = pneg %p37
      %p250 = pneg %p61
      %p251 = pneg %p58
      %s252 = smul.u32 2, %s19
      %p253 = scmp.lt.s32.totalorder %s252, 3
      %s254 = scalar_select %p253, %s252, 3
      %s255 = smul.addr %s254, 8
      %s256 = scalar_lea.vmem %s2, %s255
      %p257 = pneg %p87
      %p258 = pneg %p84
      %s259 = smul.u32 2, %s19
      %p260 = scmp.lt.s32.totalorder %s259, 3
      %s261 = scalar_select %p260, %s259, 3
      %s262 = smul.addr %s261, 8
      %s263 = scalar_lea.vmem %s3, %s262
      %p264 = pneg %p113
      %p265 = pneg %p110
      %p266 = pneg %p134
      %p267 = pneg %p131
      %p268 = pneg %p155
      %p269 = pneg %p152
      %p270 = pneg %p181
      %p271 = pneg %p178
      %s272 = smul.u32 2, %s19
      %p273 = scmp.lt.s32.totalorder %s272, 3
      %s274 = scalar_select %p273, %s272, 3
      %s275 = smul.addr %s274, 8
      %s276 = scalar_lea.vmem %s6, %s275
      %s277 = smul.u32 2, %s19
      %p278 = scmp.lt.s32.totalorder %s277, 3
      %s279 = scalar_select %p278, %s277, 3
      %s280 = smul.addr %s279, 4
      %s281 = scalar_lea.vmem %s0, %s280
      %s282 = smul.u32 2, %s19
      %s283 = smul.u32 2, %s19
      %p284 = scmp.lt.s32.totalorder %s283, 3
      %s285 = scalar_select %p284, %s283, 3
      %s286 = smul.addr %s285, 8
      %s287 = scalar_lea.vmem %s2, %s286
      %s288 = smul.u32 2, %s19
      %s289 = smul.u32 2, %s19
      %p290 = scmp.lt.s32.totalorder %s289, 3
      %s291 = scalar_select %p290, %s289, 3
      %s292 = smul.addr %s291, 8
      %s293 = scalar_lea.vmem %s3, %s292
      %s294 = smul.u32 2, %s19
      %s295 = smul.u32 2, %s19
      %p296 = scmp.lt.s32.totalorder %s295, 3
      %s297 = scalar_select %p296, %s295, 3
      %s298 = smul.addr %s297, 8
      %s299 = scalar_lea.vmem %s6, %s298
      %s300 = smul.u32 2, %s19
      %v302 = vld [vmem:[%s281] sm:$0xf]
      %v303 = vld [vmem:[%s281 + $0x4] sm:$0xf]
      %v304 = vld [vmem:[%s1] sm:$0xff]
      %v305 = vld [vmem:[%s1 + $0x8] sm:$0xff]
      %v306 = vld [vmem:[%s1 + $0x10] sm:$0xff]
      %v307 = vld [vmem:[%s1 + $0x18] sm:$0xff]
      %v308 = vpack.c.bf16 %v305, %v304
      %v309 = vpack.c.bf16 %v307, %v306
      %v312 = vunpack.c.l.b16 %v302
      %v313 = vunpack.c.l.b16 %v303
      %v314 = vpack.c.b16 %v313, %v312
      %vm315 = vcmask 261120
      %v317 = vsel %vm315, %v314, 0
      %319 = vmatprep.subr.bf16.mxu0 0
      %320 = vmatpush1.bf16.msra.mxu0 %v308
      %321 = vmatprep.subr.bf16.mxu0 0
      %322 = vmatpush1.bf16.msra.mxu0 %v309
      %323 = vmatprep.subr.bf16.mxu0 0
      %324 = vmatpush1.bf16.msra.mxu0 0
      %325 = vmatprep.subr.bf16.mxu0 0
      %326 = vmatpush1.bf16.msra.mxu0 0
      %327 = vmatprep.subr.bf16.mxu0 0
      %328 = vmatpush1.bf16.msra.mxu0 0
      %329 = vmatprep.subr.bf16.mxu0 0
      %330 = vmatpush1.bf16.msra.mxu0 0
      %331 = vmatprep.subr.bf16.mxu0 0
      %332 = vmatpush1.bf16.msra.mxu0 0
      %333 = vmatprep.subr.bf16.mxu0 0
      %334 = vmatpush1.bf16.msra.mxu0 0
      %335 = vmatprep.subr.bf16.mxu0 0
      %336 = vmatpush1.bf16.msra.mxu0 0
      %337 = vmatprep.subr.bf16.mxu0 0
      %338 = vmatpush1.bf16.msra.mxu0 0
      %339 = vmatprep.subr.bf16.mxu0 0
      %340 = vmatpush1.bf16.msra.mxu0 0
      %341 = vmatprep.subr.bf16.mxu0 0
      %342 = vmatpush1.bf16.msra.mxu0 0
      %343 = vmatprep.subr.bf16.mxu0 0
      %344 = vmatpush1.bf16.msra.mxu0 0
      %345 = vmatprep.subr.bf16.mxu0 0
      %346 = vmatpush1.bf16.msra.mxu0 0
      %347 = vmatprep.subr.bf16.mxu0 0
      %348 = vmatpush1.bf16.msra.mxu0 0
      %349 = vmatprep.subr.bf16.mxu0 0
      %350 = vmatpush1.bf16.msra.mxu0 0
      %351 = vmatprep.mubr.bf16.mxu0 0
      %352 = vmatmul.mubr.bf16.gmra.mrb[0].mxu0 %v317
      %v353 = vpop.f32.mrb[0].mxu0
      %v354 = vadd.f32 0.0, %v353
      %v355 = vpop.f32.mrb[0].mxu0
      %v356 = vpop.f32.mrb[0].mxu0
      %v357 = vadd.f32 0.0, %v356
      %v358 = vpop.f32.mrb[0].mxu0
      %359 = vdwg.mxu0
      %v360 = vld [vmem:[%s4] sm:$0x1]
      %v362 = vlaneseq
      %v363 = vshrl.u32 %v362, 7
      %v364 = vsub.s32 0, %v363
      %v365 = vrot.slane %v360, %v364
      %v367 = vmul.f32 %v354, %v365
      %v368 = vmul.f32 %v357, %v365
      %v369 = vsel %vm315, %v367, 0.0
      %370 = vadd.xlane.f32.xlu0 %v369
      %v371 = vpop.xlane.xlu0 %370
      %v372 = vsel %vm315, %v368, 0.0
      %373 = vadd.xlane.f32.xlu0 %v372
      %v374 = vpop.xlane.xlu0 %373
      %v375 = vld [vmem:[#allocation2] sm:$0x1]
      %v377 = vlaneseq
      %v378 = vshrl.u32 %v377, 7
      %v379 = vsub.s32 0, %v378
      %v380 = vrot.slane %v375, %v379
      %v382 = vadd.f32 %v371, %v380
      %v383 = vadd.f32 %v374, %v380
      %v384 = vtanh.pop %v382
      %v385 = vtanh.pop %v383
      %v386 = vld [vmem:[%s287] sm:$0xff]
      %v387 = vld [vmem:[%s287 + $0x8] sm:$0xff]
      %v388 = vld [vmem:[%s293] sm:$0xff]
      %v389 = vld [vmem:[%s293 + $0x8] sm:$0xff]
      %392 = vrot.lane.b32.xlu0 %v388, 32
      %v393 = vpop.permute.xlu0 %392
      %394 = vrot.lane.b32.xlu0 %v389, 32
      %v395 = vpop.permute.xlu0 %394
      %400 = vrot.lane.b32.xlu0 %v384, 64
      %v401 = vpop.permute.xlu0 %400
      %402 = vrot.lane.b32.xlu0 %v385, 64
      %v403 = vpop.permute.xlu0 %402
      %v406 = vsel %vm315, %v386, %v393
      %v407 = vsel %vm315, %v387, %v395
      %vm408 = vcmask 523264
      %v409 = vsel %vm408, %v406, %v401
      %v410 = vsel %vm408, %v407, %v403
      %vm411 = vcmask 531456
      %v412 = vsel %vm411, %v409, 0.0
      %v413 = vsel %vm411, %v410, 0.0
      %414 = vst [vmem:[%s299] sm:$0xff] %v412
      %415 = vst [vmem:[%s299 + $0x8] sm:$0xff] %v413
      %s416 = smul.u32 2, %s19
      %p417 = scmp.lt.s32.totalorder %s416, 3
      %s418 = scalar_select %p417, %s416, 3
      %s419 = smul.addr %s418, 8
      %s420 = scalar_lea.vmem %s6, %s419
      // Predicated region
      $region45: #{dgcnn_forward.6} parent=43 // pred_check
        %p421 = pneg %p178
      $region46: #{dgcnn_forward.6} parent=43 // pred_check_branch
        %423 = sbr.rel (%p421) target = $region48
      $region47: #{dgcnn_forward.6} parent=43 // pred_region
        %s424 = smul.u32 2, %s19
      $region48: #{dgcnn_forward.6} parent=43 // pred_fallthru
        _
    $region44: #{dgcnn_forward.6} parent=5 // pred_fallthru
      _
    %p425 = scmp.le.s32.totalorder 2, %s14
    // Predicated region
    $region49: #{dgcnn_forward.6} parent=5 // pred_check
      %p426 = pneg %p425
    $region50: #{dgcnn_forward.6} parent=5 // pred_check_branch
      %428 = sbr.rel (%p426) target = $region52
    $region51: #{dgcnn_forward.6} parent=5 // pred_region
      %s429 = ssub.s32 %s14, 2
      // Predicated region
      $region53: #{dgcnn_forward.6} parent=51 // pred_check
        %p430 = pneg %p184
      $region54: #{dgcnn_forward.6} parent=51 // pred_check_branch
        %432 = sbr.rel (%p430) target = $region56
      $region55: #{dgcnn_forward.6} parent=51 // pred_region
        %s433 = smul.u32 2, %s20
        %p434 = scmp.lt.s32.totalorder %s433, 3
        %s435 = scalar_select %p434, %s433, 3
        %s436 = smul.addr %s435, 8
        %s437 = scalar_lea.vmem %s6, %s436
      $region56: #{dgcnn_forward.6} parent=51 // pred_fallthru
        _
    $region52: #{dgcnn_forward.6} parent=5 // pred_fallthru
      _
  $region6: #{dgcnn_forward.6} parent=0 // loop_footer
    %s18 = sadd.s32 1, %s14
  $region7: #{dgcnn_forward.6} parent=0 // loop_footer_branch
    %13 = sbr.rel target = $region3
  $region8: #{dgcnn_forward.6} parent=0 // loop_exit
    _

// kernel: dgcnn_forward.4
$region0: #{dgcnn_forward.4}
  #allocation0 [shape = 'u32[]', space=smem, size = 0x4, offset = 0x4, fixed_abs, tag = 'smem constant byte address 0x4 - core index']
  #allocation1 [shape = 'u32[144,128]{1,0:T(1,128)}', space=vmem, size = 0x12000, scoped, tag = 'internal scratch']
  %s0 = inlined_call_operand.vmem [shape: bf16[32,32], index: 0, kind: input, shape index: {}]
  %s1 = inlined_call_operand.vmem [shape: f32[32,32], index: 1, kind: input, shape index: {}]
  %s2 = inlined_call_operand.vmem [shape: f32[32,32], index: 2, kind: input, shape index: {}]
  %s3 = inlined_call_operand.vmem [shape: f32[1,32], index: 3, kind: input, shape index: {}]
  %s4 = inlined_call_operand.vmem [shape: f32[32,32], index: 4, kind: output, shape index: {}]
  %s5 = sld [smem:[#allocation0]]
  $region49: #{dgcnn_forward.4} parent=0
    _
  %s7 = ssub.s32 1, %s5
  %s8 = scalar_select 0, %s7, %s5
  loop: start=0, step=1, limit=4
  $region2: #{dgcnn_forward.4} parent=0 // loop_pre_header
    _
  $region3: #{dgcnn_forward.4} parent=0 // loop_header
    %s10 = sphi 0, %s14
    %p11 = scmp.ge.s32.totalorder %s10, 4
    %s20 = sphi 0, %s22
    %s23 = sphi 0, %s20
    %s24 = sphi 0, %s23
    %s40 = sphi 0, %s24
    %s44 = sphi 0, %s44
    %s46 = sphi 0, %s44
    %s47 = sphi 0, %s46
    %s61 = sphi 0, %s47
    %s65 = sphi 0, %s65
    %s67 = sphi 0, %s65
    %s68 = sphi 0, %s67
    %s82 = sphi 0, %s68
    %s86 = sphi 0, %s86
    %s88 = sphi 0, %s86
    %s89 = sphi 0, %s88
    %s103 = sphi 0, %s89
    %s109 = sphi 0, %s111
    %s112 = sphi 0, %s109
    %s113 = sphi 0, %s112
    %s129 = sphi 0, %s113
  $region4: #{dgcnn_forward.4} parent=0 // loop_header_branch
    %13 = sbr.rel (%p11) target = $region8
  $region5: #{dgcnn_forward.4} parent=0 // loop_body
    %s15 = ssub.s32 %s10, 1
    %s16 = ssub.s32 %s10, 2
    %s17 = sadd.s32 %s10, 1
    %s18 = ssub.s32 %s10, %s17
    %p19 = scmp.eq.s32.totalorder %s18, 0
    %s21 = sadd.s32 %s20, 1
    %s22 = scalar_select %p19, %s20, %s21
    %p25 = pneg %p19
    %p26 = scmp.eq.s32.totalorder %s10, 1
    %p27 = por %p25, %p26
    %p28 = scmp.ne.s32.totalorder %s20, %s23
    %p29 = scmp.eq.s32.totalorder %s10, 0
    %p30 = por %p28, %p29
    %p31 = scmp.ne.s32.totalorder %s20, %s23
    %p32 = scmp.eq.s32.totalorder %s15, 1
    %p33 = por %p31, %p32
    %p34 = scmp.ne.s32.totalorder %s23, %s24
    %p35 = scmp.eq.s32.totalorder %s15, 0
    %p36 = por %p34, %p35
    %p37 = scmp.ne.s32.totalorder %s23, %s24
    %p38 = scmp.eq.s32.totalorder %s16, 1
    %p39 = por %p37, %p38
    %p41 = scmp.ne.s32.totalorder %s24, %s40
    %p42 = scmp.eq.s32.totalorder %s16, 0
    %p43 = por %p41, %p42
    %s45 = sadd.s32 %s44, 1
    %p48 = scmp.eq.s32.totalorder %s10, 1
    %p49 = scmp.ne.s32.totalorder %s44, %s46
    %p50 = scmp.eq.s32.totalorder %s10, 0
    %p51 = por %p49, %p50
    %p52 = scmp.ne.s32.totalorder %s44, %s46
    %p53 = scmp.eq.s32.totalorder %s15, 1
    %p54 = por %p52, %p53
    %p55 = scmp.ne.s32.totalorder %s46, %s47
    %p56 = scmp.eq.s32.totalorder %s15, 0
    %p57 = por %p55, %p56
    %p58 = scmp.ne.s32.totalorder %s46, %s47
    %p59 = scmp.eq.s32.totalorder %s16, 1
    %p60 = por %p58, %p59
    %p62 = scmp.ne.s32.totalorder %s47, %s61
    %p63 = scmp.eq.s32.totalorder %s16, 0
    %p64 = por %p62, %p63
    %s66 = sadd.s32 %s65, 1
    %p69 = scmp.eq.s32.totalorder %s10, 1
    %p70 = scmp.ne.s32.totalorder %s65, %s67
    %p71 = scmp.eq.s32.totalorder %s10, 0
    %p72 = por %p70, %p71
    %p73 = scmp.ne.s32.totalorder %s65, %s67
    %p74 = scmp.eq.s32.totalorder %s15, 1
    %p75 = por %p73, %p74
    %p76 = scmp.ne.s32.totalorder %s67, %s68
    %p77 = scmp.eq.s32.totalorder %s15, 0
    %p78 = por %p76, %p77
    %p79 = scmp.ne.s32.totalorder %s67, %s68
    %p80 = scmp.eq.s32.totalorder %s16, 1
    %p81 = por %p79, %p80
    %p83 = scmp.ne.s32.totalorder %s68, %s82
    %p84 = scmp.eq.s32.totalorder %s16, 0
    %p85 = por %p83, %p84
    %s87 = sadd.s32 %s86, 1
    %p90 = scmp.eq.s32.totalorder %s10, 1
    %p91 = scmp.ne.s32.totalorder %s86, %s88
    %p92 = scmp.eq.s32.totalorder %s10, 0
    %p93 = por %p91, %p92
    %p94 = scmp.ne.s32.totalorder %s86, %s88
    %p95 = scmp.eq.s32.totalorder %s15, 1
    %p96 = por %p94, %p95
    %p97 = scmp.ne.s32.totalorder %s88, %s89
    %p98 = scmp.eq.s32.totalorder %s15, 0
    %p99 = por %p97, %p98
    %p100 = scmp.ne.s32.totalorder %s88, %s89
    %p101 = scmp.eq.s32.totalorder %s16, 1
    %p102 = por %p100, %p101
    %p104 = scmp.ne.s32.totalorder %s89, %s103
    %p105 = scmp.eq.s32.totalorder %s16, 0
    %p106 = por %p104, %p105
    %s107 = ssub.s32 %s10, %s17
    %p108 = scmp.eq.s32.totalorder %s107, 0
    %s110 = sadd.s32 %s109, 1
    %s111 = scalar_select %p108, %s109, %s110
    %p114 = pneg %p108
    %p115 = scmp.eq.s32.totalorder %s10, 1
    %p116 = por %p114, %p115
    %p117 = scmp.ne.s32.totalorder %s109, %s112
    %p118 = scmp.eq.s32.totalorder %s10, 0
    %p119 = por %p117, %p118
    %p120 = scmp.ne.s32.totalorder %s109, %s112
    %p121 = scmp.eq.s32.totalorder %s15, 1
    %p122 = por %p120, %p121
    %p123 = scmp.ne.s32.totalorder %s112, %s113
    %p124 = scmp.eq.s32.totalorder %s15, 0
    %p125 = por %p123, %p124
    %p126 = scmp.ne.s32.totalorder %s112, %s113
    %p127 = scmp.eq.s32.totalorder %s16, 1
    %p128 = por %p126, %p127
    %p130 = scmp.ne.s32.totalorder %s113, %s129
    %p131 = scmp.eq.s32.totalorder %s16, 0
    %p132 = por %p130, %p131
    %p133 = scmp.le.s32.totalorder 1, %s10
    %p134 = scmp.lt.s32.totalorder %s10, 3
    %p135 = pnand %p133, %p134
    %p136 = pneg %p135
    // Predicated region
    $region9: #{dgcnn_forward.4} parent=5 // pred_check
      _
    $region10: #{dgcnn_forward.4} parent=5 // pred_check_branch
      %138 = sbr.rel (%p135) target = $region12
    $region11: #{dgcnn_forward.4} parent=5 // pred_region
      %s139 = ssub.s32 %s10, 1
      // Predicated region
      $region13: #{dgcnn_forward.4} parent=11 // pred_check
        %p140 = pneg %p57
      $region14: #{dgcnn_forward.4} parent=11 // pred_check_branch
        %142 = sbr.rel (%p140) target = $region16
      $region15: #{dgcnn_forward.4} parent=11 // pred_region
        _
      $region16: #{dgcnn_forward.4} parent=11 // pred_fallthru
        _
      // Predicated region
      $region17: #{dgcnn_forward.4} parent=11 // pred_check
        %p143 = pneg %p78
      $region18: #{dgcnn_forward.4} parent=11 // pred_check_branch
        %145 = sbr.rel (%p143) target = $region20
      $region19: #{dgcnn_forward.4} parent=11 // pred_region
        _
      $region20: #{dgcnn_forward.4} parent=11 // pred_fallthru
        _
      // Predicated region
      $region21: #{dgcnn_forward.4} parent=11 // pred_check
        %p146 = pneg %p99
      $region22: #{dgcnn_forward.4} parent=11 // pred_check_branch
        %148 = sbr.rel (%p146) target = $region24
      $region23: #{dgcnn_forward.4} parent=11 // pred_region
        _
      $region24: #{dgcnn_forward.4} parent=11 // pred_fallthru
        _
    $region12: #{dgcnn_forward.4} parent=5 // pred_fallthru
      _
    %p149 = scmp.lt.s32.totalorder %s10, 2
    // Predicated region
    $region25: #{dgcnn_forward.4} parent=5 // pred_check
      %p150 = pneg %p149
    $region26: #{dgcnn_forward.4} parent=5 // pred_check_branch
      %152 = sbr.rel (%p150) target = $region28
    $region27: #{dgcnn_forward.4} parent=5 // pred_region
      // Predicated region
      $region29: #{dgcnn_forward.4} parent=27 // pred_check
        %p153 = pneg %p30
      $region30: #{dgcnn_forward.4} parent=27 // pred_check_branch
        %155 = sbr.rel (%p153) target = $region32
      $region31: #{dgcnn_forward.4} parent=27 // pred_region
        %s156 = smul.u32 2, %s10
        %p157 = scmp.lt.s32.totalorder %s156, 3
        %s158 = scalar_select %p157, %s156, 3
        %s159 = smul.addr %s158, 4
        %s160 = scalar_lea.vmem %s0, %s159
        %s161 = smul.u32 2, %s10
      $region32: #{dgcnn_forward.4} parent=27 // pred_fallthru
        _
    $region28: #{dgcnn_forward.4} parent=5 // pred_fallthru
      _
    %p162 = scmp.le.s32.totalorder 1, %s10
    %p163 = scmp.lt.s32.totalorder %s10, 3
    %p164 = pnand %p162, %p163
    %p165 = pneg %p164
    // Predicated region
    $region33: #{dgcnn_forward.4} parent=5 // pred_check
      _
    $region34: #{dgcnn_forward.4} parent=5 // pred_check_branch
      %167 = sbr.rel (%p164) target = $region36
    $region35: #{dgcnn_forward.4} parent=5 // pred_region
      %s168 = ssub.s32 %s10, 1
      %s169 = smul.u32 2, %s15
      %p170 = scmp.lt.s32.totalorder %s169, 3
      %s171 = scalar_select %p170, %s169, 3
      %s172 = smul.addr %s171, 4
      %s173 = scalar_lea.vmem %s0, %s172
      %p174 = pneg %p36
      %p175 = pneg %p33
      %p176 = pneg %p57
      %p177 = pneg %p54
      %p178 = pneg %p78
      %p179 = pneg %p75
      %p180 = pneg %p99
      %p181 = pneg %p96
      %p182 = pneg %p125
      %p183 = pneg %p122
      %s184 = smul.u32 2, %s15
      %p185 = scmp.lt.s32.totalorder %s184, 3
      %s186 = scalar_select %p185, %s184, 3
      %s187 = smul.addr %s186, 8
      %s188 = scalar_lea.vmem %s4, %s187
      %s189 = smul.u32 2, %s15
      %p190 = scmp.lt.s32.totalorder %s189, 3
      %s191 = scalar_select %p190, %s189, 3
      %s192 = smul.addr %s191, 4
      %s193 = scalar_lea.vmem %s0, %s192
      %s194 = smul.u32 2, %s15
      %s195 = smul.u32 2, %s15
      %p196 = scmp.lt.s32.totalorder %s195, 3
      %s197 = scalar_select %p196, %s195, 3
      %s198 = smul.addr %s197, 8
      %s199 = scalar_lea.vmem %s4, %s198
      %s200 = smul.u32 2, %s15
      %v202 = vld [vmem:[%s1] sm:$0xff]
      %v203 = vld [vmem:[%s1 + $0x8] sm:$0xff]
      %v204 = vld [vmem:[%s1 + $0x10] sm:$0xff]
      %v205 = vld [vmem:[%s1 + $0x18] sm:$0xff]
      %v206 = vld [vmem:[%s2] sm:$0xff]
      %v207 = vld [vmem:[%s2 + $0x8] sm:$0xff]
      %v208 = vld [vmem:[%s2 + $0x10] sm:$0xff]
      %v209 = vld [vmem:[%s2 + $0x18] sm:$0xff]
      %vm210 = vcmask 261120
      %v212 = vsel %vm210, %v202, 0
      %v215 = vsel %vm210, %v203, 0
      %v218 = vsel %vm210, %v204, 0
      %v221 = vsel %vm210, %v205, 0
      %223 = vmatprep.subr.mxu0 0.0
      %224 = vmatpush1.msra.mxu0 %v206
      %225 = vmatprep.subr.mxu0 0.0
      %226 = vmatpush1.msra.mxu0 %v207
      %227 = vmatprep.subr.mxu0 0.0
      %228 = vmatpush1.msra.mxu0 %v208
      %229 = vmatprep.subr.mxu0 0.0
      %230 = vmatpush1.msra.mxu0 %v209
      %231 = vmatprep.subr.mxu0 0.0
      %232 = vmatpush1.msra.mxu0 0.0
      %233 = vmatprep.subr.mxu0 0.0
      %234 = vmatpush1.msra.mxu0 0.0
      %235 = vmatprep.subr.mxu0 0.0
      %236 = vmatpush1.msra.mxu0 0.0
      %237 = vmatprep.subr.mxu0 0.0
      %238 = vmatpush1.msra.mxu0 0.0
      %239 = vmatprep.subr.mxu0 0.0
      %240 = vmatpush1.msra.mxu0 0.0
      %241 = vmatprep.subr.mxu0 0.0
      %242 = vmatpush1.msra.mxu0 0.0
      %243 = vmatprep.subr.mxu0 0.0
      %244 = vmatpush1.msra.mxu0 0.0
      %245 = vmatprep.subr.mxu0 0.0
      %246 = vmatpush1.msra.mxu0 0.0
      %247 = vmatprep.subr.mxu0 0.0
      %248 = vmatpush1.msra.mxu0 0.0
      %249 = vmatprep.subr.mxu0 0.0
      %250 = vmatpush1.msra.mxu0 0.0
      %251 = vmatprep.subr.mxu0 0.0
      %252 = vmatpush1.msra.mxu0 0.0
      %253 = vmatprep.subr.mxu0 0.0
      %254 = vmatpush1.msra.mxu0 0.0
      %255 = vmatprep.subr.mxu0 0.0
      %256 = vmatpush1.msra.mxu0 0.0
      %257 = vmatprep.subr.mxu0 0.0
      %258 = vmatpush1.msra.mxu0 0.0
      %259 = vmatprep.subr.mxu0 0.0
      %260 = vmatpush1.msra.mxu0 0.0
      %261 = vmatprep.subr.mxu0 0.0
      %262 = vmatpush1.msra.mxu0 0.0
      %263 = vmatprep.subr.mxu0 0.0
      %264 = vmatpush1.msra.mxu0 0.0
      %265 = vmatprep.subr.mxu0 0.0
      %266 = vmatpush1.msra.mxu0 0.0
      %267 = vmatprep.subr.mxu0 0.0
      %268 = vmatpush1.msra.mxu0 0.0
      %269 = vmatprep.subr.mxu0 0.0
      %270 = vmatpush1.msra.mxu0 0.0
      %271 = vmatprep.subr.mxu0 0.0
      %272 = vmatpush1.msra.mxu0 0.0
      %273 = vmatprep.subr.mxu0 0.0
      %274 = vmatpush1.msra.mxu0 0.0
      %275 = vmatprep.subr.mxu0 0.0
      %276 = vmatpush1.msra.mxu0 0.0
      %277 = vmatprep.subr.mxu0 0.0
      %278 = vmatpush1.msra.mxu0 0.0
      %279 = vmatprep.subr.mxu0 0.0
      %280 = vmatpush1.msra.mxu0 0.0
      %281 = vmatprep.subr.mxu0 0.0
      %282 = vmatpush1.msra.mxu0 0.0
      %283 = vmatprep.subr.mxu0 0.0
      %284 = vmatpush1.msra.mxu0 0.0
      %285 = vmatprep.subr.mxu0 0.0
      %286 = vmatpush1.msra.mxu0 0.0
      %287 = vmatprep.mubr.f32.mxu0 0.0
      %288 = vmatmul.mubr.f32.gmra.mrb[0].mxu0 %v212
      %v289 = vpop.f32.mrb[0].mxu0
      %v290 = vadd.f32 0.0, %v289
      %v291 = vpop.f32.mrb[0].mxu0
      %292 = vmatprep.mubr.f32.mxu0 0.0
      %293 = vmatmul.mubr.f32.gmra.mrb[0].mxu0 %v215
      %v294 = vpop.f32.mrb[0].mxu0
      %v295 = vadd.f32 0.0, %v294
      %v296 = vpop.f32.mrb[0].mxu0
      %297 = vmatprep.mubr.f32.mxu0 0.0
      %298 = vmatmul.mubr.f32.gmra.mrb[0].mxu0 %v218
      %v299 = vpop.f32.mrb[0].mxu0
      %v300 = vadd.f32 0.0, %v299
      %v301 = vpop.f32.mrb[0].mxu0
      %302 = vmatprep.mubr.f32.mxu0 0.0
      %303 = vmatmul.mubr.f32.gmra.mrb[0].mxu0 %v221
      %v304 = vpop.f32.mrb[0].mxu0
      %v305 = vadd.f32 0.0, %v304
      %v306 = vpop.f32.mrb[0].mxu0
      %307 = vdwg.mxu0
      %v308 = vld [vmem:[%s193] sm:$0xf]
      %v309 = vld [vmem:[%s193 + $0x4] sm:$0xf]
      %v310 = vpack.c.bf16 %v295, %v290
      %v311 = vpack.c.bf16 %v305, %v300
      %v312 = vld [vmem:[%s3] sm:$0x1]
      %v314 = vlaneseq
      %v315 = vshrl.u32 %v314, 7
      %v316 = vsub.s32 0, %v315
      %v317 = vrot.slane %v312, %v316
      %v321 = vunpack.c.l.b16 %v308
      %v322 = vunpack.c.l.b16 %v309
      %v323 = vpack.c.b16 %v322, %v321
      %v325 = vsel %vm210, %v323, 0
      %327 = vmatprep.subr.bf16.mxu0 0
      %328 = vmatpush1.bf16.msra.mxu0 %v310
      %329 = vmatprep.subr.bf16.mxu0 0
      %330 = vmatpush1.bf16.msra.mxu0 %v311
      %331 = vmatprep.subr.bf16.mxu0 0
      %332 = vmatpush1.bf16.msra.mxu0 0
      %333 = vmatprep.subr.bf16.mxu0 0
      %334 = vmatpush1.bf16.msra.mxu0 0
      %335 = vmatprep.subr.bf16.mxu0 0
      %336 = vmatpush1.bf16.msra.mxu0 0
      %337 = vmatprep.subr.bf16.mxu0 0
      %338 = vmatpush1.bf16.msra.mxu0 0
      %339 = vmatprep.subr.bf16.mxu0 0
      %340 = vmatpush1.bf16.msra.mxu0 0
      %341 = vmatprep.subr.bf16.mxu0 0
      %342 = vmatpush1.bf16.msra.mxu0 0
      %343 = vmatprep.subr.bf16.mxu0 0
      %344 = vmatpush1.bf16.msra.mxu0 0
      %345 = vmatprep.subr.bf16.mxu0 0
      %346 = vmatpush1.bf16.msra.mxu0 0
      %347 = vmatprep.subr.bf16.mxu0 0
      %348 = vmatpush1.bf16.msra.mxu0 0
      %349 = vmatprep.subr.bf16.mxu0 0
      %350 = vmatpush1.bf16.msra.mxu0 0
      %351 = vmatprep.subr.bf16.mxu0 0
      %352 = vmatpush1.bf16.msra.mxu0 0
      %353 = vmatprep.subr.bf16.mxu0 0
      %354 = vmatpush1.bf16.msra.mxu0 0
      %355 = vmatprep.subr.bf16.mxu0 0
      %356 = vmatpush1.bf16.msra.mxu0 0
      %357 = vmatprep.subr.bf16.mxu0 0
      %358 = vmatpush1.bf16.msra.mxu0 0
      %359 = vmatprep.mubr.bf16.mxu0 0
      %360 = vmatmul.mubr.bf16.gmra.mrb[0].mxu0 %v325
      %v361 = vpop.f32.mrb[0].mxu0
      %v362 = vadd.f32 %v317, %v361
      %v363 = vpop.f32.mrb[0].mxu0
      %v364 = vpop.f32.mrb[0].mxu0
      %v365 = vadd.f32 %v317, %v364
      %v366 = vpop.f32.mrb[0].mxu0
      %367 = vdwg.mxu0
      %v368 = vtanh.pop %v362
      %v369 = vtanh.pop %v365
      %370 = vst.msk [vmem:[%s199] sm:$0xff] %vm210, %v368
      %371 = vst.msk [vmem:[%s199 + $0x8] sm:$0xff] %vm210, %v369
      %s372 = smul.u32 2, %s15
      %p373 = scmp.lt.s32.totalorder %s372, 3
      %s374 = scalar_select %p373, %s372, 3
      %s375 = smul.addr %s374, 8
      %s376 = scalar_lea.vmem %s4, %s375
      // Predicated region
      $region37: #{dgcnn_forward.4} parent=35 // pred_check
        %p377 = pneg %p122
      $region38: #{dgcnn_forward.4} parent=35 // pred_check_branch
        %379 = sbr.rel (%p377) target = $region40
      $region39: #{dgcnn_forward.4} parent=35 // pred_region
        %s380 = smul.u32 2, %s15
      $region40: #{dgcnn_forward.4} parent=35 // pred_fallthru
        _
    $region36: #{dgcnn_forward.4} parent=5 // pred_fallthru
      _
    %p381 = scmp.le.s32.totalorder 2, %s10
    // Predicated region
    $region41: #{dgcnn_forward.4} parent=5 // pred_check
      %p382 = pneg %p381
    $region42: #{dgcnn_forward.4} parent=5 // pred_check_branch
      %384 = sbr.rel (%p382) target = $region44
    $region43: #{dgcnn_forward.4} parent=5 // pred_region
      %s385 = ssub.s32 %s10, 2
      // Predicated region
      $region45: #{dgcnn_forward.4} parent=43 // pred_check
        %p386 = pneg %p128
      $region46: #{dgcnn_forward.4} parent=43 // pred_check_branch
        %388 = sbr.rel (%p386) target = $region48
      $region47: #{dgcnn_forward.4} parent=43 // pred_region
        %s389 = smul.u32 2, %s16
        %p390 = scmp.lt.s32.totalorder %s389, 3
        %s391 = scalar_select %p390, %s389, 3
        %s392 = smul.addr %s391, 8
        %s393 = scalar_lea.vmem %s4, %s392
      $region48: #{dgcnn_forward.4} parent=43 // pred_fallthru
        _
    $region44: #{dgcnn_forward.4} parent=5 // pred_fallthru
      _
  $region6: #{dgcnn_forward.4} parent=0 // loop_footer
    %s14 = sadd.s32 1, %s10
  $region7: #{dgcnn_forward.4} parent=0 // loop_footer_branch
    %9 = sbr.rel target = $region3
  $region8: #{dgcnn_forward.4} parent=0 // loop_exit
    _

// kernel: dgcnn_forward.7
$region0: #{dgcnn_forward.7}
  #allocation0 [shape = 'u32[]', space=smem, size = 0x4, offset = 0x4, fixed_abs, tag = 'smem constant byte address 0x4 - core index']
  #allocation1 [shape = 'u32[144,128]{1,0:T(1,128)}', space=vmem, size = 0x12000, scoped, tag = 'internal scratch']
  #allocation2 [shape = 'f32[1,1]{1,0:T(1,128)S(1)}', space=vmem, size = 0x200, scoped, tag = 'scoped memory for dgcnn_forward.7']
  %s0 = inlined_call_operand.vmem [shape: f32[2,10,128], index: 0, kind: input, shape index: {}]
  %s1 = inlined_call_operand.vmem [shape: f32[128,16], index: 1, kind: input, shape index: {}]
  %s2 = inlined_call_operand.vmem [shape: f32[1,16], index: 2, kind: input, shape index: {}]
  %s3 = inlined_call_operand.vmem [shape: f32[5,16,32], index: 3, kind: input, shape index: {}]
  %s4 = inlined_call_operand.vmem [shape: f32[1,32], index: 4, kind: input, shape index: {}]
  %s5 = inlined_call_operand.vmem [shape: f32[1,32,128], index: 5, kind: input, shape index: {}]
  %s6 = inlined_call_operand.vmem [shape: f32[1,128], index: 6, kind: input, shape index: {}]
  %s7 = inlined_call_operand.vmem [shape: f32[1,128], index: 7, kind: input, shape index: {}]
  %s8 = inlined_call_operand.<no memory space> [shape: f32[1,1], index: 8, kind: input, shape index: {}]
  %s9 = inlined_call_operand.vmem [shape: f32[2,1,128], index: 9, kind: output, shape index: {}]
  %s10 = sld [smem:[#allocation0]]
  $region69: #{dgcnn_forward.7} parent=0
    _
  %s12 = ssub.s32 1, %s10
  %s13 = scalar_select 0, %s12, %s10
  %v14 = vstv %s8
  %15 = vst [vmem:[#allocation2] sm:$0x1] %v14
  loop: start=0, step=1, limit=4
  $region2: #{dgcnn_forward.7} parent=0 // loop_pre_header
    _
  $region3: #{dgcnn_forward.7} parent=0 // loop_header
    %s17 = sphi 0, %s21
    %p18 = scmp.ge.s32.totalorder %s17, 4
    %s27 = sphi 0, %s29
    %s30 = sphi 0, %s27
    %s31 = sphi 0, %s30
    %s47 = sphi 0, %s31
    %s51 = sphi 0, %s51
    %s53 = sphi 0, %s51
    %s54 = sphi 0, %s53
    %s68 = sphi 0, %s54
    %s72 = sphi 0, %s72
    %s74 = sphi 0, %s72
    %s75 = sphi 0, %s74
    %s89 = sphi 0, %s75
    %s93 = sphi 0, %s93
    %s95 = sphi 0, %s93
    %s96 = sphi 0, %s95
    %s110 = sphi 0, %s96
    %s114 = sphi 0, %s114
    %s116 = sphi 0, %s114
    %s117 = sphi 0, %s116
    %s131 = sphi 0, %s117
    %s135 = sphi 0, %s135
    %s137 = sphi 0, %s135
    %s138 = sphi 0, %s137
    %s152 = sphi 0, %s138
    %s156 = sphi 0, %s156
    %s158 = sphi 0, %s156
    %s159 = sphi 0, %s158
    %s173 = sphi 0, %s159
    %s177 = sphi 0, %s177
    %s179 = sphi 0, %s177
    %s180 = sphi 0, %s179
    %s194 = sphi 0, %s180
    %s198 = sphi 0, %s198
    %s200 = sphi 0, %s198
    %s201 = sphi 0, %s200
    %s215 = sphi 0, %s201
    %s221 = sphi 0, %s223
    %s224 = sphi 0, %s221
    %s225 = sphi 0, %s224
    %s241 = sphi 0, %s225
  $region4: #{dgcnn_forward.7} parent=0 // loop_header_branch
    %20 = sbr.rel (%p18) target = $region8
  $region5: #{dgcnn_forward.7} parent=0 // loop_body
    %s22 = ssub.s32 %s17, 1
    %s23 = ssub.s32 %s17, 2
    %s24 = sadd.s32 %s17, 1
    %s25 = ssub.s32 %s17, %s24
    %p26 = scmp.eq.s32.totalorder %s25, 0
    %s28 = sadd.s32 %s27, 1
    %s29 = scalar_select %p26, %s27, %s28
    %p32 = pneg %p26
    %p33 = scmp.eq.s32.totalorder %s17, 1
    %p34 = por %p32, %p33
    %p35 = scmp.ne.s32.totalorder %s27, %s30
    %p36 = scmp.eq.s32.totalorder %s17, 0
    %p37 = por %p35, %p36
    %p38 = scmp.ne.s32.totalorder %s27, %s30
    %p39 = scmp.eq.s32.totalorder %s22, 1
    %p40 = por %p38, %p39
    %p41 = scmp.ne.s32.totalorder %s30, %s31
    %p42 = scmp.eq.s32.totalorder %s22, 0
    %p43 = por %p41, %p42
    %p44 = scmp.ne.s32.totalorder %s30, %s31
    %p45 = scmp.eq.s32.totalorder %s23, 1
    %p46 = por %p44, %p45
    %p48 = scmp.ne.s32.totalorder %s31, %s47
    %p49 = scmp.eq.s32.totalorder %s23, 0
    %p50 = por %p48, %p49
    %s52 = sadd.s32 %s51, 1
    %p55 = scmp.eq.s32.totalorder %s17, 1
    %p56 = scmp.ne.s32.totalorder %s51, %s53
    %p57 = scmp.eq.s32.totalorder %s17, 0
    %p58 = por %p56, %p57
    %p59 = scmp.ne.s32.totalorder %s51, %s53
    %p60 = scmp.eq.s32.totalorder %s22, 1
    %p61 = por %p59, %p60
    %p62 = scmp.ne.s32.totalorder %s53, %s54
    %p63 = scmp.eq.s32.totalorder %s22, 0
    %p64 = por %p62, %p63
    %p65 = scmp.ne.s32.totalorder %s53, %s54
    %p66 = scmp.eq.s32.totalorder %s23, 1
    %p67 = por %p65, %p66
    %p69 = scmp.ne.s32.totalorder %s54, %s68
    %p70 = scmp.eq.s32.totalorder %s23, 0
    %p71 = por %p69, %p70
    %s73 = sadd.s32 %s72, 1
    %p76 = scmp.eq.s32.totalorder %s17, 1
    %p77 = scmp.ne.s32.totalorder %s72, %s74
    %p78 = scmp.eq.s32.totalorder %s17, 0
    %p79 = por %p77, %p78
    %p80 = scmp.ne.s32.totalorder %s72, %s74
    %p81 = scmp.eq.s32.totalorder %s22, 1
    %p82 = por %p80, %p81
    %p83 = scmp.ne.s32.totalorder %s74, %s75
    %p84 = scmp.eq.s32.totalorder %s22, 0
    %p85 = por %p83, %p84
    %p86 = scmp.ne.s32.totalorder %s74, %s75
    %p87 = scmp.eq.s32.totalorder %s23, 1
    %p88 = por %p86, %p87
    %p90 = scmp.ne.s32.totalorder %s75, %s89
    %p91 = scmp.eq.s32.totalorder %s23, 0
    %p92 = por %p90, %p91
    %s94 = sadd.s32 %s93, 1
    %p97 = scmp.eq.s32.totalorder %s17, 1
    %p98 = scmp.ne.s32.totalorder %s93, %s95
    %p99 = scmp.eq.s32.totalorder %s17, 0
    %p100 = por %p98, %p99
    %p101 = scmp.ne.s32.totalorder %s93, %s95
    %p102 = scmp.eq.s32.totalorder %s22, 1
    %p103 = por %p101, %p102
    %p104 = scmp.ne.s32.totalorder %s95, %s96
    %p105 = scmp.eq.s32.totalorder %s22, 0
    %p106 = por %p104, %p105
    %p107 = scmp.ne.s32.totalorder %s95, %s96
    %p108 = scmp.eq.s32.totalorder %s23, 1
    %p109 = por %p107, %p108
    %p111 = scmp.ne.s32.totalorder %s96, %s110
    %p112 = scmp.eq.s32.totalorder %s23, 0
    %p113 = por %p111, %p112
    %s115 = sadd.s32 %s114, 1
    %p118 = scmp.eq.s32.totalorder %s17, 1
    %p119 = scmp.ne.s32.totalorder %s114, %s116
    %p120 = scmp.eq.s32.totalorder %s17, 0
    %p121 = por %p119, %p120
    %p122 = scmp.ne.s32.totalorder %s114, %s116
    %p123 = scmp.eq.s32.totalorder %s22, 1
    %p124 = por %p122, %p123
    %p125 = scmp.ne.s32.totalorder %s116, %s117
    %p126 = scmp.eq.s32.totalorder %s22, 0
    %p127 = por %p125, %p126
    %p128 = scmp.ne.s32.totalorder %s116, %s117
    %p129 = scmp.eq.s32.totalorder %s23, 1
    %p130 = por %p128, %p129
    %p132 = scmp.ne.s32.totalorder %s117, %s131
    %p133 = scmp.eq.s32.totalorder %s23, 0
    %p134 = por %p132, %p133
    %s136 = sadd.s32 %s135, 1
    %p139 = scmp.eq.s32.totalorder %s17, 1
    %p140 = scmp.ne.s32.totalorder %s135, %s137
    %p141 = scmp.eq.s32.totalorder %s17, 0
    %p142 = por %p140, %p141
    %p143 = scmp.ne.s32.totalorder %s135, %s137
    %p144 = scmp.eq.s32.totalorder %s22, 1
    %p145 = por %p143, %p144
    %p146 = scmp.ne.s32.totalorder %s137, %s138
    %p147 = scmp.eq.s32.totalorder %s22, 0
    %p148 = por %p146, %p147
    %p149 = scmp.ne.s32.totalorder %s137, %s138
    %p150 = scmp.eq.s32.totalorder %s23, 1
    %p151 = por %p149, %p150
    %p153 = scmp.ne.s32.totalorder %s138, %s152
    %p154 = scmp.eq.s32.totalorder %s23, 0
    %p155 = por %p153, %p154
    %s157 = sadd.s32 %s156, 1
    %p160 = scmp.eq.s32.totalorder %s17, 1
    %p161 = scmp.ne.s32.totalorder %s156, %s158
    %p162 = scmp.eq.s32.totalorder %s17, 0
    %p163 = por %p161, %p162
    %p164 = scmp.ne.s32.totalorder %s156, %s158
    %p165 = scmp.eq.s32.totalorder %s22, 1
    %p166 = por %p164, %p165
    %p167 = scmp.ne.s32.totalorder %s158, %s159
    %p168 = scmp.eq.s32.totalorder %s22, 0
    %p169 = por %p167, %p168
    %p170 = scmp.ne.s32.totalorder %s158, %s159
    %p171 = scmp.eq.s32.totalorder %s23, 1
    %p172 = por %p170, %p171
    %p174 = scmp.ne.s32.totalorder %s159, %s173
    %p175 = scmp.eq.s32.totalorder %s23, 0
    %p176 = por %p174, %p175
    %s178 = sadd.s32 %s177, 1
    %p181 = scmp.eq.s32.totalorder %s17, 1
    %p182 = scmp.ne.s32.totalorder %s177, %s179
    %p183 = scmp.eq.s32.totalorder %s17, 0
    %p184 = por %p182, %p183
    %p185 = scmp.ne.s32.totalorder %s177, %s179
    %p186 = scmp.eq.s32.totalorder %s22, 1
    %p187 = por %p185, %p186
    %p188 = scmp.ne.s32.totalorder %s179, %s180
    %p189 = scmp.eq.s32.totalorder %s22, 0
    %p190 = por %p188, %p189
    %p191 = scmp.ne.s32.totalorder %s179, %s180
    %p192 = scmp.eq.s32.totalorder %s23, 1
    %p193 = por %p191, %p192
    %p195 = scmp.ne.s32.totalorder %s180, %s194
    %p196 = scmp.eq.s32.totalorder %s23, 0
    %p197 = por %p195, %p196
    %s199 = sadd.s32 %s198, 1
    %p202 = scmp.eq.s32.totalorder %s17, 1
    %p203 = scmp.ne.s32.totalorder %s198, %s200
    %p204 = scmp.eq.s32.totalorder %s17, 0
    %p205 = por %p203, %p204
    %p206 = scmp.ne.s32.totalorder %s198, %s200
    %p207 = scmp.eq.s32.totalorder %s22, 1
    %p208 = por %p206, %p207
    %p209 = scmp.ne.s32.totalorder %s200, %s201
    %p210 = scmp.eq.s32.totalorder %s22, 0
    %p211 = por %p209, %p210
    %p212 = scmp.ne.s32.totalorder %s200, %s201
    %p213 = scmp.eq.s32.totalorder %s23, 1
    %p214 = por %p212, %p213
    %p216 = scmp.ne.s32.totalorder %s201, %s215
    %p217 = scmp.eq.s32.totalorder %s23, 0
    %p218 = por %p216, %p217
    %s219 = ssub.s32 %s17, %s24
    %p220 = scmp.eq.s32.totalorder %s219, 0
    %s222 = sadd.s32 %s221, 1
    %s223 = scalar_select %p220, %s221, %s222
    %p226 = pneg %p220
    %p227 = scmp.eq.s32.totalorder %s17, 1
    %p228 = por %p226, %p227
    %p229 = scmp.ne.s32.totalorder %s221, %s224
    %p230 = scmp.eq.s32.totalorder %s17, 0
    %p231 = por %p229, %p230
    %p232 = scmp.ne.s32.totalorder %s221, %s224
    %p233 = scmp.eq.s32.totalorder %s22, 1
    %p234 = por %p232, %p233
    %p235 = scmp.ne.s32.totalorder %s224, %s225
    %p236 = scmp.eq.s32.totalorder %s22, 0
    %p237 = por %p235, %p236
    %p238 = scmp.ne.s32.totalorder %s224, %s225
    %p239 = scmp.eq.s32.totalorder %s23, 1
    %p240 = por %p238, %p239
    %p242 = scmp.ne.s32.totalorder %s225, %s241
    %p243 = scmp.eq.s32.totalorder %s23, 0
    %p244 = por %p242, %p243
    %p245 = scmp.le.s32.totalorder 1, %s17
    %p246 = scmp.lt.s32.totalorder %s17, 3
    %p247 = pnand %p245, %p246
    %p248 = pneg %p247
    // Predicated region
    $region9: #{dgcnn_forward.7} parent=5 // pred_check
      _
    $region10: #{dgcnn_forward.7} parent=5 // pred_check_branch
      %250 = sbr.rel (%p247) target = $region12
    $region11: #{dgcnn_forward.7} parent=5 // pred_region
      %s251 = ssub.s32 %s17, 1
      // Predicated region
      $region13: #{dgcnn_forward.7} parent=11 // pred_check
        %p252 = pneg %p64
      $region14: #{dgcnn_forward.7} parent=11 // pred_check_branch
        %254 = sbr.rel (%p252) target = $region16
      $region15: #{dgcnn_forward.7} parent=11 // pred_region
        _
      $region16: #{dgcnn_forward.7} parent=11 // pred_fallthru
        _
      // Predicated region
      $region17: #{dgcnn_forward.7} parent=11 // pred_check
        %p255 = pneg %p85
      $region18: #{dgcnn_forward.7} parent=11 // pred_check_branch
        %257 = sbr.rel (%p255) target = $region20
      $region19: #{dgcnn_forward.7} parent=11 // pred_region
        _
      $region20: #{dgcnn_forward.7} parent=11 // pred_fallthru
        _
      // Predicated region
      $region21: #{dgcnn_forward.7} parent=11 // pred_check
        %p258 = pneg %p106
      $region22: #{dgcnn_forward.7} parent=11 // pred_check_branch
        %260 = sbr.rel (%p258) target = $region24
      $region23: #{dgcnn_forward.7} parent=11 // pred_region
        _
      $region24: #{dgcnn_forward.7} parent=11 // pred_fallthru
        _
      // Predicated region
      $region25: #{dgcnn_forward.7} parent=11 // pred_check
        %p261 = pneg %p127
      $region26: #{dgcnn_forward.7} parent=11 // pred_check_branch
        %263 = sbr.rel (%p261) target = $region28
      $region27: #{dgcnn_forward.7} parent=11 // pred_region
        _
      $region28: #{dgcnn_forward.7} parent=11 // pred_fallthru
        _
      // Predicated region
      $region29: #{dgcnn_forward.7} parent=11 // pred_check
        %p264 = pneg %p148
      $region30: #{dgcnn_forward.7} parent=11 // pred_check_branch
        %266 = sbr.rel (%p264) target = $region32
      $region31: #{dgcnn_forward.7} parent=11 // pred_region
        _
      $region32: #{dgcnn_forward.7} parent=11 // pred_fallthru
        _
      // Predicated region
      $region33: #{dgcnn_forward.7} parent=11 // pred_check
        %p267 = pneg %p169
      $region34: #{dgcnn_forward.7} parent=11 // pred_check_branch
        %269 = sbr.rel (%p267) target = $region36
      $region35: #{dgcnn_forward.7} parent=11 // pred_region
        _
      $region36: #{dgcnn_forward.7} parent=11 // pred_fallthru
        _
      // Predicated region
      $region37: #{dgcnn_forward.7} parent=11 // pred_check
        %p270 = pneg %p190
      $region38: #{dgcnn_forward.7} parent=11 // pred_check_branch
        %272 = sbr.rel (%p270) target = $region40
      $region39: #{dgcnn_forward.7} parent=11 // pred_region
        _
      $region40: #{dgcnn_forward.7} parent=11 // pred_fallthru
        _
      // Predicated region
      $region41: #{dgcnn_forward.7} parent=11 // pred_check
        %p273 = pneg %p211
      $region42: #{dgcnn_forward.7} parent=11 // pred_check_branch
        %275 = sbr.rel (%p273) target = $region44
      $region43: #{dgcnn_forward.7} parent=11 // pred_region
        _
      $region44: #{dgcnn_forward.7} parent=11 // pred_fallthru
        _
    $region12: #{dgcnn_forward.7} parent=5 // pred_fallthru
      _
    %p276 = scmp.lt.s32.totalorder %s17, 2
    // Predicated region
    $region45: #{dgcnn_forward.7} parent=5 // pred_check
      %p277 = pneg %p276
    $region46: #{dgcnn_forward.7} parent=5 // pred_check_branch
      %279 = sbr.rel (%p277) target = $region48
    $region47: #{dgcnn_forward.7} parent=5 // pred_region
      // Predicated region
      $region49: #{dgcnn_forward.7} parent=47 // pred_check
        %p280 = pneg %p37
      $region50: #{dgcnn_forward.7} parent=47 // pred_check_branch
        %282 = sbr.rel (%p280) target = $region52
      $region51: #{dgcnn_forward.7} parent=47 // pred_region
        %p283 = scmp.lt.s32.totalorder %s17, 1
        %s284 = scalar_select %p283, %s17, 1
        %s285 = smul.addr %s284, 2
        %s286 = smul.addr %s285, 8
        %s287 = scalar_lea.vmem %s0, %s286
      $region52: #{dgcnn_forward.7} parent=47 // pred_fallthru
        _
    $region48: #{dgcnn_forward.7} parent=5 // pred_fallthru
      _
    %p288 = scmp.le.s32.totalorder 1, %s17
    %p289 = scmp.lt.s32.totalorder %s17, 3
    %p290 = pnand %p288, %p289
    %p291 = pneg %p290
    // Predicated region
    $region53: #{dgcnn_forward.7} parent=5 // pred_check
      _
    $region54: #{dgcnn_forward.7} parent=5 // pred_check_branch
      %293 = sbr.rel (%p290) target = $region56
    $region55: #{dgcnn_forward.7} parent=5 // pred_region
      %s294 = ssub.s32 %s17, 1
      %p295 = scmp.lt.s32.totalorder %s22, 1
      %s296 = scalar_select %p295, %s22, 1
      %s297 = smul.addr %s296, 2
      %s298 = smul.addr %s297, 8
      %s299 = scalar_lea.vmem %s0, %s298
      %p300 = pneg %p43
      %p301 = pneg %p40
      %p302 = pneg %p64
      %p303 = pneg %p61
      %p304 = pneg %p85
      %p305 = pneg %p82
      %p306 = pneg %p106
      %p307 = pneg %p103
      %p308 = pneg %p127
      %p309 = pneg %p124
      %p310 = pneg %p148
      %p311 = pneg %p145
      %p312 = pneg %p169
      %p313 = pneg %p166
      %p314 = pneg %p190
      %p315 = pneg %p187
      %p316 = pneg %p211
      %p317 = pneg %p208
      %p318 = pneg %p237
      %p319 = pneg %p234
      %p320 = scmp.lt.s32.totalorder %s22, 1
      %s321 = scalar_select %p320, %s22, 1
      %s322 = scalar_lea.vmem %s9, %s321
      %p323 = scmp.lt.s32.totalorder %s22, 1
      %s324 = scalar_select %p323, %s22, 1
      %s325 = smul.addr %s324, 2
      %s326 = smul.addr %s325, 8
      %s327 = scalar_lea.vmem %s0, %s326
      %p328 = scmp.lt.s32.totalorder %s22, 1
      %s329 = scalar_select %p328, %s22, 1
      %s330 = scalar_lea.vmem %s9, %s329
      %v331 = vld [vmem:[%s327] sm:$0xff]
      %v332 = vld [vmem:[%s327 + $0x8] sm:$0x3]
      %v333 = vld [vmem:[%s1] sm:$0xff]
      %v334 = vld [vmem:[%s1 + $0x8] sm:$0xff]
      %v335 = vld [vmem:[%s1 + $0x10] sm:$0xff]
      %v336 = vld [vmem:[%s1 + $0x18] sm:$0xff]
      %v337 = vld [vmem:[%s1 + $0x20] sm:$0xff]
      %v338 = vld [vmem:[%s1 + $0x28] sm:$0xff]
      %v339 = vld [vmem:[%s1 + $0x30] sm:$0xff]
      %v340 = vld [vmem:[%s1 + $0x38] sm:$0xff]
      %v341 = vld [vmem:[%s1 + $0x40] sm:$0xff]
      %v342 = vld [vmem:[%s1 + $0x48] sm:$0xff]
      %v343 = vld [vmem:[%s1 + $0x50] sm:$0xff]
      %v344 = vld [vmem:[%s1 + $0x58] sm:$0xff]
      %v345 = vld [vmem:[%s1 + $0x60] sm:$0xff]
      %v346 = vld [vmem:[%s1 + $0x68] sm:$0xff]
      %v347 = vld [vmem:[%s1 + $0x70] sm:$0xff]
      %v348 = vld [vmem:[%s1 + $0x78] sm:$0xff]
      %v349 = vld [vmem:[%s2] sm:$0x1]
      %v351 = vlaneseq
      %v352 = vshrl.u32 %v351, 7
      %v353 = vsub.s32 0, %v352
      %v354 = vrot.slane %v349, %v353
      %356 = vmatprep.subr.mxu0 0.0
      %357 = vmatpush1.msra.mxu0 %v333
      %358 = vmatprep.subr.mxu0 0.0
      %359 = vmatpush1.msra.mxu0 %v334
      %360 = vmatprep.subr.mxu0 0.0
      %361 = vmatpush1.msra.mxu0 %v335
      %362 = vmatprep.subr.mxu0 0.0
      %363 = vmatpush1.msra.mxu0 %v336
      %364 = vmatprep.subr.mxu0 0.0
      %365 = vmatpush1.msra.mxu0 %v337
      %366 = vmatprep.subr.mxu0 0.0
      %367 = vmatpush1.msra.mxu0 %v338
      %368 = vmatprep.subr.mxu0 0.0
      %369 = vmatpush1.msra.mxu0 %v339
      %370 = vmatprep.subr.mxu0 0.0
      %371 = vmatpush1.msra.mxu0 %v340
      %372 = vmatprep.subr.mxu0 0.0
      %373 = vmatpush1.msra.mxu0 %v341
      %374 = vmatprep.subr.mxu0 0.0
      %375 = vmatpush1.msra.mxu0 %v342
      %376 = vmatprep.subr.mxu0 0.0
      %377 = vmatpush1.msra.mxu0 %v343
      %378 = vmatprep.subr.mxu0 0.0
      %379 = vmatpush1.msra.mxu0 %v344
      %380 = vmatprep.subr.mxu0 0.0
      %381 = vmatpush1.msra.mxu0 %v345
      %382 = vmatprep.subr.mxu0 0.0
      %383 = vmatpush1.msra.mxu0 %v346
      %384 = vmatprep.subr.mxu0 0.0
      %385 = vmatpush1.msra.mxu0 %v347
      %386 = vmatprep.subr.mxu0 0.0
      %387 = vmatpush1.msra.mxu0 %v348
      %388 = vmatprep.subr.mxu0 0.0
      %389 = vmatpush1.msra.mxu0 0.0
      %390 = vmatprep.subr.mxu0 0.0
      %391 = vmatpush1.msra.mxu0 0.0
      %392 = vmatprep.subr.mxu0 0.0
      %393 = vmatpush1.msra.mxu0 0.0
      %394 = vmatprep.subr.mxu0 0.0
      %395 = vmatpush1.msra.mxu0 0.0
      %396 = vmatprep.subr.mxu0 0.0
      %397 = vmatpush1.msra.mxu0 0.0
      %398 = vmatprep.subr.mxu0 0.0
      %399 = vmatpush1.msra.mxu0 0.0
      %400 = vmatprep.subr.mxu0 0.0
      %401 = vmatpush1.msra.mxu0 0.0
      %402 = vmatprep.subr.mxu0 0.0
      %403 = vmatpush1.msra.mxu0 0.0
      %404 = vmatprep.subr.mxu0 0.0
      %405 = vmatpush1.msra.mxu0 0.0
      %406 = vmatprep.subr.mxu0 0.0
      %407 = vmatpush1.msra.mxu0 0.0
      %408 = vmatprep.subr.mxu0 0.0
      %409 = vmatpush1.msra.mxu0 0.0
      %410 = vmatprep.subr.mxu0 0.0
      %411 = vmatpush1.msra.mxu0 0.0
      %412 = vmatprep.subr.mxu0 0.0
      %413 = vmatpush1.msra.mxu0 0.0
      %414 = vmatprep.subr.mxu0 0.0
      %415 = vmatpush1.msra.mxu0 0.0
      %416 = vmatprep.subr.mxu0 0.0
      %417 = vmatpush1.msra.mxu0 0.0
      %418 = vmatprep.subr.mxu0 0.0
      %419 = vmatpush1.msra.mxu0 0.0
      %420 = vmatprep.mubr.f32.mxu0 0.0
      %421 = vmatmul.mubr.f32.gmra.mrb[0].mxu0 %v331
      %v422 = vpop.f32.mrb[0].mxu0
      %v423 = vadd.f32 %v354, %v422
      %v424 = vpop.f32.mrb[0].mxu0
      %425 = vmatprep.mubr.f32.mxu0 0.0
      %426 = vmatmul.mubr.f32.gmra.mrb[0].mxu0 %v332
      %v427 = vpop.f32.mrb[0].mxu0
      %v428 = vadd.f32 %v354, %v427
      %v429 = vpop.f32.mrb[0].mxu0
      %430 = vdwg.mxu0
      %v431 = vmax.f32 %v423, 0.0
      %v432 = vmax.f32 %v428, 0.0
      %v434 = vrot.slane %v431, 1
      %v436 = vmax.f32 %v431, %v434
      %v438 = vrot.slane %v432, 1
      %v440 = vmax.f32 %v432, %v438
      %v442 = vrot.slane %v436, 1
      %v444 = vrot.slane %v436, 2
      %v446 = vrot.slane %v436, 3
      %v449 = vrot.slane %v440, 4
      %vm451 = vcmask 1040384
      %v452 = vsel %vm451, %v436, %v442
      %vm453 = vcmask 1041408
      %v454 = vsel %vm453, %v452, %v444
      %vm455 = vcmask 1042432
      %v456 = vsel %vm455, %v454, %v446
      %vm457 = vcmask 1043456
      %v458 = vsel %vm457, %v456, %v449
      %v459 = vld [vmem:[%s4] sm:$0x1]
      %v460 = vld [vmem:[%s3] sm:$0xff]
      %v461 = vld [vmem:[%s3 + $0x8] sm:$0xff]
      %vm462 = vcmask 130048
      %v464 = vsel %vm462, %v458, 0
      %466 = vmatprep.subr.mxu0 0.0
      %467 = vmatpush1.msra.mxu0 %v460
      %468 = vmatprep.subr.mxu0 0.0
      %469 = vmatpush1.msra.mxu0 %v461
      %470 = vmatprep.subr.mxu0 0.0
      %471 = vmatpush1.msra.mxu0 0.0
      %472 = vmatprep.subr.mxu0 0.0
      %473 = vmatpush1.msra.mxu0 0.0
      %474 = vmatprep.subr.mxu0 0.0
      %475 = vmatpush1.msra.mxu0 0.0
      %476 = vmatprep.subr.mxu0 0.0
      %477 = vmatpush1.msra.mxu0 0.0
      %478 = vmatprep.subr.mxu0 0.0
      %479 = vmatpush1.msra.mxu0 0.0
      %480 = vmatprep.subr.mxu0 0.0
      %481 = vmatpush1.msra.mxu0 0.0
      %482 = vmatprep.subr.mxu0 0.0
      %483 = vmatpush1.msra.mxu0 0.0
      %484 = vmatprep.subr.mxu0 0.0
      %485 = vmatpush1.msra.mxu0 0.0
      %486 = vmatprep.subr.mxu0 0.0
      %487 = vmatpush1.msra.mxu0 0.0
      %488 = vmatprep.subr.mxu0 0.0
      %489 = vmatpush1.msra.mxu0 0.0
      %490 = vmatprep.subr.mxu0 0.0
      %491 = vmatpush1.msra.mxu0 0.0
      %492 = vmatprep.subr.mxu0 0.0
      %493 = vmatpush1.msra.mxu0 0.0
      %494 = vmatprep.subr.mxu0 0.0
      %495 = vmatpush1.msra.mxu0 0.0
      %496 = vmatprep.subr.mxu0 0.0
      %497 = vmatpush1.msra.mxu0 0.0
      %498 = vmatprep.subr.mxu0 0.0
      %499 = vmatpush1.msra.mxu0 0.0
      %500 = vmatprep.subr.mxu0 0.0
      %501 = vmatpush1.msra.mxu0 0.0
      %502 = vmatprep.subr.mxu0 0.0
      %503 = vmatpush1.msra.mxu0 0.0
      %504 = vmatprep.subr.mxu0 0.0
      %505 = vmatpush1.msra.mxu0 0.0
      %506 = vmatprep.subr.mxu0 0.0
      %507 = vmatpush1.msra.mxu0 0.0
      %508 = vmatprep.subr.mxu0 0.0
      %509 = vmatpush1.msra.mxu0 0.0
      %510 = vmatprep.subr.mxu0 0.0
      %511 = vmatpush1.msra.mxu0 0.0
      %512 = vmatprep.subr.mxu0 0.0
      %513 = vmatpush1.msra.mxu0 0.0
      %514 = vmatprep.subr.mxu0 0.0
      %515 = vmatpush1.msra.mxu0 0.0
      %516 = vmatprep.subr.mxu0 0.0
      %517 = vmatpush1.msra.mxu0 0.0
      %518 = vmatprep.subr.mxu0 0.0
      %519 = vmatpush1.msra.mxu0 0.0
      %520 = vmatprep.subr.mxu0 0.0
      %521 = vmatpush1.msra.mxu0 0.0
      %522 = vmatprep.subr.mxu0 0.0
      %523 = vmatpush1.msra.mxu0 0.0
      %524 = vmatprep.subr.mxu0 0.0
      %525 = vmatpush1.msra.mxu0 0.0
      %526 = vmatprep.subr.mxu0 0.0
      %527 = vmatpush1.msra.mxu0 0.0
      %528 = vmatprep.subr.mxu0 0.0
      %529 = vmatpush1.msra.mxu0 0.0
      %530 = vmatprep.mubr.f32.mxu0 0.0
      %531 = vmatmul.mubr.f32.gmra.mrb[0].mxu0 %v464
      %v532 = vpop.f32.mrb[0].mxu0
      %v533 = vadd.f32 0.0, %v532
      %v534 = vpop.f32.mrb[0].mxu0
      %535 = vdwg.mxu0
      %v536 = vadd.f32 %v459, %v533
      %s537 = scalar_lea.vmem %s3, 16
      %v538 = vld [vmem:[%s537] sm:$0xff]
      %v539 = vld [vmem:[%s537 + $0x8] sm:$0xff]
      %v540 = vrot.slane %v458, 1
      %v541 = vsel %vm462, %v540, 0
      %543 = vmatprep.subr.mxu0 0.0
      %544 = vmatpush1.msra.mxu0 %v538
      %545 = vmatprep.subr.mxu0 0.0
      %546 = vmatpush1.msra.mxu0 %v539
      %547 = vmatprep.subr.mxu0 0.0
      %548 = vmatpush1.msra.mxu0 0.0
      %549 = vmatprep.subr.mxu0 0.0
      %550 = vmatpush1.msra.mxu0 0.0
      %551 = vmatprep.subr.mxu0 0.0
      %552 = vmatpush1.msra.mxu0 0.0
      %553 = vmatprep.subr.mxu0 0.0
      %554 = vmatpush1.msra.mxu0 0.0
      %555 = vmatprep.subr.mxu0 0.0
      %556 = vmatpush1.msra.mxu0 0.0
      %557 = vmatprep.subr.mxu0 0.0
      %558 = vmatpush1.msra.mxu0 0.0
      %559 = vmatprep.subr.mxu0 0.0
      %560 = vmatpush1.msra.mxu0 0.0
      %561 = vmatprep.subr.mxu0 0.0
      %562 = vmatpush1.msra.mxu0 0.0
      %563 = vmatprep.subr.mxu0 0.0
      %564 = vmatpush1.msra.mxu0 0.0
      %565 = vmatprep.subr.mxu0 0.0
      %566 = vmatpush1.msra.mxu0 0.0
      %567 = vmatprep.subr.mxu0 0.0
      %568 = vmatpush1.msra.mxu0 0.0
      %569 = vmatprep.subr.mxu0 0.0
      %570 = vmatpush1.msra.mxu0 0.0
      %571 = vmatprep.subr.mxu0 0.0
      %572 = vmatpush1.msra.mxu0 0.0
      %573 = vmatprep.subr.mxu0 0.0
      %574 = vmatpush1.msra.mxu0 0.0
      %575 = vmatprep.subr.mxu0 0.0
      %576 = vmatpush1.msra.mxu0 0.0
      %577 = vmatprep.subr.mxu0 0.0
      %578 = vmatpush1.msra.mxu0 0.0
      %579 = vmatprep.subr.mxu0 0.0
      %580 = vmatpush1.msra.mxu0 0.0
      %581 = vmatprep.subr.mxu0 0.0
      %582 = vmatpush1.msra.mxu0 0.0
      %583 = vmatprep.subr.mxu0 0.0
      %584 = vmatpush1.msra.mxu0 0.0
      %585 = vmatprep.subr.mxu0 0.0
      %586 = vmatpush1.msra.mxu0 0.0
      %587 = vmatprep.subr.mxu0 0.0
      %588 = vmatpush1.msra.mxu0 0.0
      %589 = vmatprep.subr.mxu0 0.0
      %590 = vmatpush1.msra.mxu0 0.0
      %591 = vmatprep.subr.mxu0 0.0
      %592 = vmatpush1.msra.mxu0 0.0
      %593 = vmatprep.subr.mxu0 0.0
      %594 = vmatpush1.msra.mxu0 0.0
      %595 = vmatprep.subr.mxu0 0.0
      %596 = vmatpush1.msra.mxu0 0.0
      %597 = vmatprep.subr.mxu0 0.0
      %598 = vmatpush1.msra.mxu0 0.0
      %599 = vmatprep.subr.mxu0 0.0
      %600 = vmatpush1.msra.mxu0 0.0
      %601 = vmatprep.subr.mxu0 0.0
      %602 = vmatpush1.msra.mxu0 0.0
      %603 = vmatprep.subr.mxu0 0.0
      %604 = vmatpush1.msra.mxu0 0.0
      %605 = vmatprep.subr.mxu0 0.0
      %606 = vmatpush1.msra.mxu0 0.0
      %607 = vmatprep.mubr.f32.mxu0 0.0
      %608 = vmatmul.mubr.f32.gmra.mrb[0].mxu0 %v541
      %v609 = vpop.f32.mrb[0].mxu0
      %v610 = vadd.f32 0.0, %v609
      %v611 = vpop.f32.mrb[0].mxu0
      %612 = vdwg.mxu0
      %v613 = vadd.f32 %v536, %v610
      %s614 = scalar_lea.vmem %s3, 32
      %v615 = vld [vmem:[%s614] sm:$0xff]
      %v616 = vld [vmem:[%s614 + $0x8] sm:$0xff]
      %v617 = vrot.slane %v458, 2
      %v618 = vsel %vm462, %v617, 0
      %620 = vmatprep.subr.mxu0 0.0
      %621 = vmatpush1.msra.mxu0 %v615
      %622 = vmatprep.subr.mxu0 0.0
      %623 = vmatpush1.msra.mxu0 %v616
      %624 = vmatprep.subr.mxu0 0.0
      %625 = vmatpush1.msra.mxu0 0.0
      %626 = vmatprep.subr.mxu0 0.0
      %627 = vmatpush1.msra.mxu0 0.0
      %628 = vmatprep.subr.mxu0 0.0
      %629 = vmatpush1.msra.mxu0 0.0
      %630 = vmatprep.subr.mxu0 0.0
      %631 = vmatpush1.msra.mxu0 0.0
      %632 = vmatprep.subr.mxu0 0.0
      %633 = vmatpush1.msra.mxu0 0.0
      %634 = vmatprep.subr.mxu0 0.0
      %635 = vmatpush1.msra.mxu0 0.0
      %636 = vmatprep.subr.mxu0 0.0
      %637 = vmatpush1.msra.mxu0 0.0
      %638 = vmatprep.subr.mxu0 0.0
      %639 = vmatpush1.msra.mxu0 0.0
      %640 = vmatprep.subr.mxu0 0.0
      %641 = vmatpush1.msra.mxu0 0.0
      %642 = vmatprep.subr.mxu0 0.0
      %643 = vmatpush1.msra.mxu0 0.0
      %644 = vmatprep.subr.mxu0 0.0
      %645 = vmatpush1.msra.mxu0 0.0
      %646 = vmatprep.subr.mxu0 0.0
      %647 = vmatpush1.msra.mxu0 0.0
      %648 = vmatprep.subr.mxu0 0.0
      %649 = vmatpush1.msra.mxu0 0.0
      %650 = vmatprep.subr.mxu0 0.0
      %651 = vmatpush1.msra.mxu0 0.0
      %652 = vmatprep.subr.mxu0 0.0
      %653 = vmatpush1.msra.mxu0 0.0
      %654 = vmatprep.subr.mxu0 0.0
      %655 = vmatpush1.msra.mxu0 0.0
      %656 = vmatprep.subr.mxu0 0.0
      %657 = vmatpush1.msra.mxu0 0.0
      %658 = vmatprep.subr.mxu0 0.0
      %659 = vmatpush1.msra.mxu0 0.0
      %660 = vmatprep.subr.mxu0 0.0
      %661 = vmatpush1.msra.mxu0 0.0
      %662 = vmatprep.subr.mxu0 0.0
      %663 = vmatpush1.msra.mxu0 0.0
      %664 = vmatprep.subr.mxu0 0.0
      %665 = vmatpush1.msra.mxu0 0.0
      %666 = vmatprep.subr.mxu0 0.0
      %667 = vmatpush1.msra.mxu0 0.0
      %668 = vmatprep.subr.mxu0 0.0
      %669 = vmatpush1.msra.mxu0 0.0
      %670 = vmatprep.subr.mxu0 0.0
      %671 = vmatpush1.msra.mxu0 0.0
      %672 = vmatprep.subr.mxu0 0.0
      %673 = vmatpush1.msra.mxu0 0.0
      %674 = vmatprep.subr.mxu0 0.0
      %675 = vmatpush1.msra.mxu0 0.0
      %676 = vmatprep.subr.mxu0 0.0
      %677 = vmatpush1.msra.mxu0 0.0
      %678 = vmatprep.subr.mxu0 0.0
      %679 = vmatpush1.msra.mxu0 0.0
      %680 = vmatprep.subr.mxu0 0.0
      %681 = vmatpush1.msra.mxu0 0.0
      %682 = vmatprep.subr.mxu0 0.0
      %683 = vmatpush1.msra.mxu0 0.0
      %684 = vmatprep.mubr.f32.mxu0 0.0
      %685 = vmatmul.mubr.f32.gmra.mrb[0].mxu0 %v618
      %v686 = vpop.f32.mrb[0].mxu0
      %v687 = vadd.f32 0.0, %v686
      %v688 = vpop.f32.mrb[0].mxu0
      %689 = vdwg.mxu0
      %v690 = vadd.f32 %v613, %v687
      %s691 = scalar_lea.vmem %s3, 48
      %v692 = vld [vmem:[%s691] sm:$0xff]
      %v693 = vld [vmem:[%s691 + $0x8] sm:$0xff]
      %v694 = vrot.slane %v458, 3
      %v695 = vsel %vm462, %v694, 0
      %697 = vmatprep.subr.mxu0 0.0
      %698 = vmatpush1.msra.mxu0 %v692
      %699 = vmatprep.subr.mxu0 0.0
      %700 = vmatpush1.msra.mxu0 %v693
      %701 = vmatprep.subr.mxu0 0.0
      %702 = vmatpush1.msra.mxu0 0.0
      %703 = vmatprep.subr.mxu0 0.0
      %704 = vmatpush1.msra.mxu0 0.0
      %705 = vmatprep.subr.mxu0 0.0
      %706 = vmatpush1.msra.mxu0 0.0
      %707 = vmatprep.subr.mxu0 0.0
      %708 = vmatpush1.msra.mxu0 0.0
      %709 = vmatprep.subr.mxu0 0.0
      %710 = vmatpush1.msra.mxu0 0.0
      %711 = vmatprep.subr.mxu0 0.0
      %712 = vmatpush1.msra.mxu0 0.0
      %713 = vmatprep.subr.mxu0 0.0
      %714 = vmatpush1.msra.mxu0 0.0
      %715 = vmatprep.subr.mxu0 0.0
      %716 = vmatpush1.msra.mxu0 0.0
      %717 = vmatprep.subr.mxu0 0.0
      %718 = vmatpush1.msra.mxu0 0.0
      %719 = vmatprep.subr.mxu0 0.0
      %720 = vmatpush1.msra.mxu0 0.0
      %721 = vmatprep.subr.mxu0 0.0
      %722 = vmatpush1.msra.mxu0 0.0
      %723 = vmatprep.subr.mxu0 0.0
      %724 = vmatpush1.msra.mxu0 0.0
      %725 = vmatprep.subr.mxu0 0.0
      %726 = vmatpush1.msra.mxu0 0.0
      %727 = vmatprep.subr.mxu0 0.0
      %728 = vmatpush1.msra.mxu0 0.0
      %729 = vmatprep.subr.mxu0 0.0
      %730 = vmatpush1.msra.mxu0 0.0
      %731 = vmatprep.subr.mxu0 0.0
      %732 = vmatpush1.msra.mxu0 0.0
      %733 = vmatprep.subr.mxu0 0.0
      %734 = vmatpush1.msra.mxu0 0.0
      %735 = vmatprep.subr.mxu0 0.0
      %736 = vmatpush1.msra.mxu0 0.0
      %737 = vmatprep.subr.mxu0 0.0
      %738 = vmatpush1.msra.mxu0 0.0
      %739 = vmatprep.subr.mxu0 0.0
      %740 = vmatpush1.msra.mxu0 0.0
      %741 = vmatprep.subr.mxu0 0.0
      %742 = vmatpush1.msra.mxu0 0.0
      %743 = vmatprep.subr.mxu0 0.0
      %744 = vmatpush1.msra.mxu0 0.0
      %745 = vmatprep.subr.mxu0 0.0
      %746 = vmatpush1.msra.mxu0 0.0
      %747 = vmatprep.subr.mxu0 0.0
      %748 = vmatpush1.msra.mxu0 0.0
      %749 = vmatprep.subr.mxu0 0.0
      %750 = vmatpush1.msra.mxu0 0.0
      %751 = vmatprep.subr.mxu0 0.0
      %752 = vmatpush1.msra.mxu0 0.0
      %753 = vmatprep.subr.mxu0 0.0
      %754 = vmatpush1.msra.mxu0 0.0
      %755 = vmatprep.subr.mxu0 0.0
      %756 = vmatpush1.msra.mxu0 0.0
      %757 = vmatprep.subr.mxu0 0.0
      %758 = vmatpush1.msra.mxu0 0.0
      %759 = vmatprep.subr.mxu0 0.0
      %760 = vmatpush1.msra.mxu0 0.0
      %761 = vmatprep.mubr.f32.mxu0 0.0
      %762 = vmatmul.mubr.f32.gmra.mrb[0].mxu0 %v695
      %v763 = vpop.f32.mrb[0].mxu0
      %v764 = vadd.f32 0.0, %v763
      %v765 = vpop.f32.mrb[0].mxu0
      %766 = vdwg.mxu0
      %v767 = vadd.f32 %v690, %v764
      %s768 = scalar_lea.vmem %s3, 64
      %v769 = vld [vmem:[%s768] sm:$0xff]
      %v770 = vld [vmem:[%s768 + $0x8] sm:$0xff]
      %v771 = vrot.slane %v458, 4
      %v772 = vsel %vm462, %v771, 0
      %774 = vmatprep.subr.mxu0 0.0
      %775 = vmatpush1.msra.mxu0 %v769
      %776 = vmatprep.subr.mxu0 0.0
      %777 = vmatpush1.msra.mxu0 %v770
      %778 = vmatprep.subr.mxu0 0.0
      %779 = vmatpush1.msra.mxu0 0.0
      %780 = vmatprep.subr.mxu0 0.0
      %781 = vmatpush1.msra.mxu0 0.0
      %782 = vmatprep.subr.mxu0 0.0
      %783 = vmatpush1.msra.mxu0 0.0
      %784 = vmatprep.subr.mxu0 0.0
      %785 = vmatpush1.msra.mxu0 0.0
      %786 = vmatprep.subr.mxu0 0.0
      %787 = vmatpush1.msra.mxu0 0.0
      %788 = vmatprep.subr.mxu0 0.0
      %789 = vmatpush1.msra.mxu0 0.0
      %790 = vmatprep.subr.mxu0 0.0
      %791 = vmatpush1.msra.mxu0 0.0
      %792 = vmatprep.subr.mxu0 0.0
      %793 = vmatpush1.msra.mxu0 0.0
      %794 = vmatprep.subr.mxu0 0.0
      %795 = vmatpush1.msra.mxu0 0.0
      %796 = vmatprep.subr.mxu0 0.0
      %797 = vmatpush1.msra.mxu0 0.0
      %798 = vmatprep.subr.mxu0 0.0
      %799 = vmatpush1.msra.mxu0 0.0
      %800 = vmatprep.subr.mxu0 0.0
      %801 = vmatpush1.msra.mxu0 0.0
      %802 = vmatprep.subr.mxu0 0.0
      %803 = vmatpush1.msra.mxu0 0.0
      %804 = vmatprep.subr.mxu0 0.0
      %805 = vmatpush1.msra.mxu0 0.0
      %806 = vmatprep.subr.mxu0 0.0
      %807 = vmatpush1.msra.mxu0 0.0
      %808 = vmatprep.subr.mxu0 0.0
      %809 = vmatpush1.msra.mxu0 0.0
      %810 = vmatprep.subr.mxu0 0.0
      %811 = vmatpush1.msra.mxu0 0.0
      %812 = vmatprep.subr.mxu0 0.0
      %813 = vmatpush1.msra.mxu0 0.0
      %814 = vmatprep.subr.mxu0 0.0
      %815 = vmatpush1.msra.mxu0 0.0
      %816 = vmatprep.subr.mxu0 0.0
      %817 = vmatpush1.msra.mxu0 0.0
      %818 = vmatprep.subr.mxu0 0.0
      %819 = vmatpush1.msra.mxu0 0.0
      %820 = vmatprep.subr.mxu0 0.0
      %821 = vmatpush1.msra.mxu0 0.0
      %822 = vmatprep.subr.mxu0 0.0
      %823 = vmatpush1.msra.mxu0 0.0
      %824 = vmatprep.subr.mxu0 0.0
      %825 = vmatpush1.msra.mxu0 0.0
      %826 = vmatprep.subr.mxu0 0.0
      %827 = vmatpush1.msra.mxu0 0.0
      %828 = vmatprep.subr.mxu0 0.0
      %829 = vmatpush1.msra.mxu0 0.0
      %830 = vmatprep.subr.mxu0 0.0
      %831 = vmatpush1.msra.mxu0 0.0
      %832 = vmatprep.subr.mxu0 0.0
      %833 = vmatpush1.msra.mxu0 0.0
      %834 = vmatprep.subr.mxu0 0.0
      %835 = vmatpush1.msra.mxu0 0.0
      %836 = vmatprep.subr.mxu0 0.0
      %837 = vmatpush1.msra.mxu0 0.0
      %838 = vmatprep.mubr.f32.mxu0 0.0
      %839 = vmatmul.mubr.f32.gmra.mrb[0].mxu0 %v772
      %v840 = vpop.f32.mrb[0].mxu0
      %v841 = vadd.f32 0.0, %v840
      %v842 = vpop.f32.mrb[0].mxu0
      %843 = vdwg.mxu0
      %v844 = vadd.f32 %v767, %v841
      %v845 = vmax.f32 %v844, 0.0
      %v846 = vld [vmem:[%s6] sm:$0x1]
      %v847 = vld [vmem:[%s5] sm:$0xff]
      %v848 = vld [vmem:[%s5 + $0x8] sm:$0xff]
      %v849 = vld [vmem:[%s5 + $0x10] sm:$0xff]
      %v850 = vld [vmem:[%s5 + $0x18] sm:$0xff]
      %vm851 = vcmask 261120
      %v853 = vsel %vm851, %v845, 0
      %855 = vmatprep.subr.mxu0 0.0
      %856 = vmatpush1.msra.mxu0 %v847
      %857 = vmatprep.subr.mxu0 0.0
      %858 = vmatpush1.msra.mxu0 %v848
      %859 = vmatprep.subr.mxu0 0.0
      %860 = vmatpush1.msra.mxu0 %v849
      %861 = vmatprep.subr.mxu0 0.0
      %862 = vmatpush1.msra.mxu0 %v850
      %863 = vmatprep.subr.mxu0 0.0
      %864 = vmatpush1.msra.mxu0 0.0
      %865 = vmatprep.subr.mxu0 0.0
      %866 = vmatpush1.msra.mxu0 0.0
      %867 = vmatprep.subr.mxu0 0.0
      %868 = vmatpush1.msra.mxu0 0.0
      %869 = vmatprep.subr.mxu0 0.0
      %870 = vmatpush1.msra.mxu0 0.0
      %871 = vmatprep.subr.mxu0 0.0
      %872 = vmatpush1.msra.mxu0 0.0
      %873 = vmatprep.subr.mxu0 0.0
      %874 = vmatpush1.msra.mxu0 0.0
      %875 = vmatprep.subr.mxu0 0.0
      %876 = vmatpush1.msra.mxu0 0.0
      %877 = vmatprep.subr.mxu0 0.0
      %878 = vmatpush1.msra.mxu0 0.0
      %879 = vmatprep.subr.mxu0 0.0
      %880 = vmatpush1.msra.mxu0 0.0
      %881 = vmatprep.subr.mxu0 0.0
      %882 = vmatpush1.msra.mxu0 0.0
      %883 = vmatprep.subr.mxu0 0.0
      %884 = vmatpush1.msra.mxu0 0.0
      %885 = vmatprep.subr.mxu0 0.0
      %886 = vmatpush1.msra.mxu0 0.0
      %887 = vmatprep.subr.mxu0 0.0
      %888 = vmatpush1.msra.mxu0 0.0
      %889 = vmatprep.subr.mxu0 0.0
      %890 = vmatpush1.msra.mxu0 0.0
      %891 = vmatprep.subr.mxu0 0.0
      %892 = vmatpush1.msra.mxu0 0.0
      %893 = vmatprep.subr.mxu0 0.0
      %894 = vmatpush1.msra.mxu0 0.0
      %895 = vmatprep.subr.mxu0 0.0
      %896 = vmatpush1.msra.mxu0 0.0
      %897 = vmatprep.subr.mxu0 0.0
      %898 = vmatpush1.msra.mxu0 0.0
      %899 = vmatprep.subr.mxu0 0.0
      %900 = vmatpush1.msra.mxu0 0.0
      %901 = vmatprep.subr.mxu0 0.0
      %902 = vmatpush1.msra.mxu0 0.0
      %903 = vmatprep.subr.mxu0 0.0
      %904 = vmatpush1.msra.mxu0 0.0
      %905 = vmatprep.subr.mxu0 0.0
      %906 = vmatpush1.msra.mxu0 0.0
      %907 = vmatprep.subr.mxu0 0.0
      %908 = vmatpush1.msra.mxu0 0.0
      %909 = vmatprep.subr.mxu0 0.0
      %910 = vmatpush1.msra.mxu0 0.0
      %911 = vmatprep.subr.mxu0 0.0
      %912 = vmatpush1.msra.mxu0 0.0
      %913 = vmatprep.subr.mxu0 0.0
      %914 = vmatpush1.msra.mxu0 0.0
      %915 = vmatprep.subr.mxu0 0.0
      %916 = vmatpush1.msra.mxu0 0.0
      %917 = vmatprep.subr.mxu0 0.0
      %918 = vmatpush1.msra.mxu0 0.0
      %919 = vmatprep.mubr.f32.mxu0 0.0
      %920 = vmatmul.mubr.f32.gmra.mrb[0].mxu0 %v853
      %v921 = vpop.f32.mrb[0].mxu0
      %v922 = vadd.f32 0.0, %v921
      %v923 = vpop.f32.mrb[0].mxu0
      %924 = vdwg.mxu0
      %v925 = vadd.f32 %v846, %v922
      %v926 = vmax.f32 %v925, 0.0
      %v927 = vld [vmem:[%s7] sm:$0x1]
      %v928 = vmul.f32 %v926, %v927
      %v929 = vsel %vm451, %v928, 0.0
      %930 = vadd.xlane.f32.xlu0 %v929
      %v931 = vpop.xlane.xlu0 %930
      %v932 = vld [vmem:[#allocation2] sm:$0x1]
      %v933 = vadd.f32 %v931, %v932
      %vm934 = vcmask 7168
      %v935 = vsel %vm934, %v933, 0.0
      %936 = vst [vmem:[%s330] sm:$0x1] %v935
      %p937 = scmp.lt.s32.totalorder %s22, 1
      %s938 = scalar_select %p937, %s22, 1
      %s939 = scalar_lea.vmem %s9, %s938
      // Predicated region
      $region57: #{dgcnn_forward.7} parent=55 // pred_check
        %p940 = pneg %p234
      $region58: #{dgcnn_forward.7} parent=55 // pred_check_branch
        %942 = sbr.rel (%p940) target = $region60
      $region59: #{dgcnn_forward.7} parent=55 // pred_region
        _
      $region60: #{dgcnn_forward.7} parent=55 // pred_fallthru
        _
    $region56: #{dgcnn_forward.7} parent=5 // pred_fallthru
      _
    %p943 = scmp.le.s32.totalorder 2, %s17
    // Predicated region
    $region61: #{dgcnn_forward.7} parent=5 // pred_check
      %p944 = pneg %p943
    $region62: #{dgcnn_forward.7} parent=5 // pred_check_branch
      %946 = sbr.rel (%p944) target = $region64
    $region63: #{dgcnn_forward.7} parent=5 // pred_region
      %s947 = ssub.s32 %s17, 2
      // Predicated region
      $region65: #{dgcnn_forward.7} parent=63 // pred_check
        %p948 = pneg %p240
      $region66: #{dgcnn_forward.7} parent=63 // pred_check_branch
        %950 = sbr.rel (%p948) target = $region68
      $region67: #{dgcnn_forward.7} parent=63 // pred_region
        %p951 = scmp.lt.s32.totalorder %s23, 1
        %s952 = scalar_select %p951, %s23, 1
        %s953 = scalar_lea.vmem %s9, %s952
      $region68: #{dgcnn_forward.7} parent=63 // pred_fallthru
        _
    $region64: #{dgcnn_forward.7} parent=5 // pred_fallthru
      _
  $region6: #{dgcnn_forward.7} parent=0 // loop_footer
    %s21 = sadd.s32 1, %s17
  $region7: #{dgcnn_forward.7} parent=0 // loop_footer_branch
    %16 = sbr.rel target = $region3
  $region8: #{dgcnn_forward.7} parent=0 // loop_exit
    _

</llo_original>
